<compile_context>
chip_gen: v7x
topology: tpu7x:2x2x1
jax: 0.10.0
libtpu: 0.0.40
codegen_flags: <defaults>
</compile_context>

<pallas_src>
import functools

import jax
import jax.numpy as jnp
from jax.experimental import pallas as pl
from jax.experimental.pallas import tpu as pltpu


# --------------------------------------------------------------------------- #
# Kernel
# --------------------------------------------------------------------------- #
def _tsmixer_kernel(x_ref,
                    w1t_ref, b1_ref, w2t_ref, b2_ref,
                    w3_ref, b3_ref, w4_ref, b4_ref,
                    wpt_ref, bp_ref,
                    o_ref,
                    *, e_layers: int, bb: int, C: int, compute_dtype):
    """Processes one block of `bb` batch rows (bb*C residual rows) per grid step.

    Layout: the residual stream is channel-major, xT[b*C + c, l] = x[b, l, c].

    x_ref   : (bb*C, L)   input block  (time along lanes)
    w1t_ref : (E, L, D)   temporal Linear(seq_len -> d_model).weight, transposed
    b1_ref  : (E, 1, D)
    w2t_ref : (E, D, L)   temporal Linear(d_model -> seq_len).weight, transposed
    b2_ref  : (E, 1, L)
    w3_ref  : (E, D, C)   channel  Linear(enc_in -> d_model).weight (native [out,in])
    b3_ref  : (E, D, 1)
    w4_ref  : (E, C, D)   channel  Linear(d_model -> enc_in).weight (native)
    b4_ref  : (E, C, 1)
    wpt_ref : (L, P)      projection Linear(seq_len -> pred_len).weight, transposed
    bp_ref  : (1, P)
    o_ref   : (bb*C, P)   output block (pred_len along lanes -> lane-dense stores)
    """
    L = x_ref.shape[1]
    D = w1t_ref.shape[2]
    f32 = jnp.float32

    xT = x_ref[...].astype(f32)                       # residual stream, f32, [bb*C, L]

    for e in range(e_layers):                         # e_layers is small & static
        # ---- temporal mixing: one matmul pair, M = bb*C, lanes = D then L ----
        h = jnp.dot(xT.astype(compute_dtype), w1t_ref[e],
                    preferred_element_type=f32) + b1_ref[e]            # [bb*C, D]
        h = jnp.maximum(h, 0.0).astype(compute_dtype)
        t = jnp.dot(h, w2t_ref[e],
                    preferred_element_type=f32) + b2_ref[e]            # [bb*C, L]
        xT = xT + t                                                    # residual

        # ---- channel mixing: per-batch-row left-multiplies, N = L lanes ----
        w3e = w3_ref[e]                               # [D, C]
        w4e = w4_ref[e]                               # [C, D]
        # Hoist bias broadcasts out of the loop (broadcast_in_dim is not CSE'd).
        b3_bc = jnp.broadcast_to(b3_ref[e], (D, L)).astype(f32)
        b4_bc = jnp.broadcast_to(b4_ref[e], (C, L)).astype(f32)
        cm_rows = []
        for b in range(bb):
            xb = xT[b * C:(b + 1) * C, :].astype(compute_dtype)        # [C, L]
            h2 = jnp.dot(w3e, xb, preferred_element_type=f32) + b3_bc  # [D, L]
            h2 = jnp.maximum(h2, 0.0).astype(compute_dtype)
            cm_rows.append(
                jnp.dot(w4e, h2, preferred_element_type=f32) + b4_bc)  # [C, L]
        cm = cm_rows[0] if bb == 1 else jnp.concatenate(cm_rows, axis=0)
        xT = xT + cm                                                   # residual

    # ---- projection: one matmul, lane-dense [bb*C, P] written directly ----
    y = jnp.dot(xT.astype(compute_dtype), wpt_ref[...],
                preferred_element_type=f32) + bp_ref[...]              # [bb*C, P]
    o_ref[...] = y.astype(o_ref.dtype)


# --------------------------------------------------------------------------- #
# Wrapper helpers
# --------------------------------------------------------------------------- #
def _device_kind():
    try:
        return jax.devices()[0].device_kind.lower()
    except Exception:          # device query only; never masks kernel errors
        return ""


def _vmem_capacity_bytes(kind):
    # v7x has 64 MiB VMEM per TensorCore; v5e / v6e have 128 MiB.
    return (64 if "v7" in kind else 128) * 1024 * 1024


def _num_tensorcores(kind):
    return 2 if "v7" in kind else 1


def _footprint_bytes(bb, L, C, D, P, weight_bytes):
    """Approximate per-grid-step VMEM footprint (f32 residual + activations
    + double-buffered I/O blocks + resident weights)."""
    m = bb * C
    act = 4 * (3 * m * L + m * D + m * P + bb * L * (D + C))   # f32 intermediates
    io = 2 * 4 * m * (L + P)                                   # double-buffered in/out
    return int(weight_bytes + act + io)


def _pick_batch_block(B, L, C, D, P, weight_bytes, kind):
    """Largest bb (divisor of B, sublane-aligned) that fits the VMEM budget,
    leaving >= num_tensorcores grid blocks when possible (v7x: 2 TCs)."""
    budget = int(0.7 * _vmem_capacity_bytes(kind))
    want_blocks = _num_tensorcores(kind)
    cands = [d for d in range(B, 0, -1)
             if B % d == 0 and (d == B or (d * C) % 8 == 0)]
    fitting = [d for d in cands if _footprint_bytes(d, L, C, D, P, weight_bytes) <= budget]
    if fitting:
        pref = [d for d in fitting if B // d >= want_blocks]
        return pref[0] if pref else fitting[0]
    return cands[-1]                       # best effort: smallest legal block


# --------------------------------------------------------------------------- #
# Wrapper
# --------------------------------------------------------------------------- #
def tsmixer_forward(x, params, *, e_layers: int, pred_len: int,
                    batch_block=None, compute_dtype=jnp.bfloat16):
    """x: [B, L, C] float32. Returns [B, pred_len, C]."""
    B, L, C = x.shape
    (w1t, b1, w2t, b2, w3, b3, w4, b4, wpt, bp) = params
    P = pred_len
    D = w1t.shape[-1]
    assert wpt.shape == (L, P)

    cdt = jnp.dtype(compute_dtype)
    if cdt != jnp.dtype(jnp.float32):
        # bf16 MXU operands; biases stay f32 (f32 accumulation + f32 elementwise).
        w1t, w2t, w3, w4, wpt = (a.astype(cdt) for a in (w1t, w2t, w3, w4, wpt))
    weight_args = (w1t, b1, w2t, b2, w3, b3, w4, b4, wpt, bp)

    # Resident weights are double-buffered by the pipeline (constant index_map
    # means they are only DMA'd once, but two buffers are allocated).
    weight_bytes = 2 * sum(int(a.size) * a.dtype.itemsize for a in weight_args)

    kind = _device_kind()
    if batch_block is None:
        bb = _pick_batch_block(B, L, C, D, P, weight_bytes, kind)
    else:
        bb = int(batch_block)
    assert B % bb == 0, "batch_block must divide the batch size"
    assert bb == B or (bb * C) % 8 == 0, \
        "batch_block*enc_in must be a multiple of 8 (sublane tiling) or equal B"
    nb = B // bb

    # Channel-major, lane-dense layouts (cheap XLA plumbing outside the kernel):
    #   input  [B, L, C] -> [B*C, L]   (time along lanes)
    #   output [B*C, P]  -> [B, P, C]
    x_cl = jnp.swapaxes(x, 1, 2).reshape(B * C, L)

    kernel = functools.partial(_tsmixer_kernel, e_layers=e_layers,
                               bb=bb, C=C, compute_dtype=cdt)

    def weight_spec(shape):
        zeros = (0,) * len(shape)
        return pl.BlockSpec(shape, lambda i, _z=zeros: _z)

    in_specs = [pl.BlockSpec((bb * C, L), lambda i: (i, 0))]
    in_specs += [weight_spec(w.shape) for w in weight_args]

    flops = 8 * B * C * L * D * e_layers + 2 * B * C * L * P
    bytes_accessed = (int(x_cl.size) * x_cl.dtype.itemsize
                      + B * C * P * x.dtype.itemsize
                      + sum(int(a.size) * a.dtype.itemsize for a in weight_args))

    vmem_limit = min(max(int(1.5 * _footprint_bytes(bb, L, C, D, P, weight_bytes)),
                         32 * 1024 * 1024),
                     _vmem_capacity_bytes(kind))

    out = pl.pallas_call(
        kernel,
        out_shape=jax.ShapeDtypeStruct((B * C, P), x.dtype),
        grid_spec=pltpu.PrefetchScalarGridSpec(
            num_scalar_prefetch=0,
            grid=(nb,),
            in_specs=in_specs,
            out_specs=pl.BlockSpec((bb * C, P), lambda i: (i, 0)),
        ),
        compiler_params=pltpu.CompilerParams(
            dimension_semantics=("parallel",),
            vmem_limit_bytes=vmem_limit,
        ),
        cost_estimate=pl.CostEstimate(flops=flops, transcendentals=0,
                                      bytes_accessed=bytes_accessed),
    )(x_cl, *weight_args)

    return out.reshape(B, C, P).transpose(0, 2, 1)        # [B, P, C]


# --------------------------------------------------------------------------- #
# Parameters & pure-JAX reference
# --------------------------------------------------------------------------- #
def init_params(key, *, seq_len, enc_in, d_model, pred_len, e_layers):
    """Deterministic init.

    Temporal / projection weights are stored pre-transposed [in, out] (right-
    multiplied in the kernel); channel weights in native PyTorch [out, in]
    layout (left-multiplied).  All biases are stored in broadcast-ready shapes.
    """
    ks = jax.random.split(key, 10)
    s = 0.05
    L, C, D, P, E = seq_len, enc_in, d_model, pred_len, e_layers
    w1t = s * jax.random.normal(ks[0], (E, L, D), jnp.float32)   # Linear(L->D).weight.T
    b1 = s * jax.random.normal(ks[1], (E, 1, D), jnp.float32)
    w2t = s * jax.random.normal(ks[2], (E, D, L), jnp.float32)   # Linear(D->L).weight.T
    b2 = s * jax.random.normal(ks[3], (E, 1, L), jnp.float32)
    w3 = s * jax.random.normal(ks[4], (E, D, C), jnp.float32)    # Linear(C->D).weight
    b3 = s * jax.random.normal(ks[5], (E, D, 1), jnp.float32)
    w4 = s * jax.random.normal(ks[6], (E, C, D), jnp.float32)    # Linear(D->C).weight
    b4 = s * jax.random.normal(ks[7], (E, C, 1), jnp.float32)
    wpt = s * jax.random.normal(ks[8], (L, P), jnp.float32)      # Linear(L->P).weight.T
    bp = s * jax.random.normal(ks[9], (1, P), jnp.float32)
    return (w1t, b1, w2t, b2, w3, b3, w4, b4, wpt, bp)


def reference_forward(x, params, *, e_layers, pred_len):
    """Pure-JAX reference mirroring the PyTorch forward (eval mode)."""
    (w1t, b1, w2t, b2, w3, b3, w4, b4, wpt, bp) = params
    for e in range(e_layers):
        xt = jnp.swapaxes(x, 1, 2)                               # [B, C, L]
        h = jnp.maximum(xt @ w1t[e] + b1[e], 0.0)                # [B, C, D]
        t = h @ w2t[e] + b2[e]                                   # [B, C, L]
        x = x + jnp.swapaxes(t, 1, 2)
        h2 = jnp.maximum(x @ w3[e].T + b3[e][:, 0], 0.0)         # [B, L, D]
        x = x + (h2 @ w4[e].T + b4[e][:, 0])                     # [B, L, C]
    y = jnp.swapaxes(x, 1, 2) @ wpt + bp                         # [B, C, P]
    y = jnp.swapaxes(y, 1, 2)                                    # [B, P, C]
    return y[:, -pred_len:, :]


# --------------------------------------------------------------------------- #
# Demo / correctness check
# --------------------------------------------------------------------------- #
if __name__ == "__main__":
    B, seq_len, enc_in, d_model, pred_len, e_layers = 2, 16, 8, 32, 12, 2

    key = jax.random.PRNGKey(0)
    kx, kp = jax.random.split(key)
    x = jax.random.normal(kx, (B, seq_len, enc_in), jnp.float32)
    params = init_params(kp, seq_len=seq_len, enc_in=enc_in,
                         d_model=d_model, pred_len=pred_len, e_layers=e_layers)

    ref = reference_forward(x, params, e_layers=e_layers, pred_len=pred_len)

    # Exact f32 MXU operands — tight tolerance.
    out_f32 = tsmixer_forward(x, params, e_layers=e_layers, pred_len=pred_len,
                              compute_dtype=jnp.float32)
    out_f32 = jax.block_until_ready(out_f32)
    assert out_f32.shape == (B, pred_len, enc_in), out_f32.shape
    assert jnp.allclose(out_f32, ref, atol=1e-4, rtol=1e-4), "f32 mismatch"

    # Default path: bf16 MXU operands, f32 accumulation & elementwise.
    out = tsmixer_forward(x, params, e_layers=e_layers, pred_len=pred_len)
    out = jax.block_until_ready(out)
    assert out.shape == (B, pred_len, enc_in)
    assert jnp.allclose(out, ref, atol=5e-2, rtol=5e-2), "bf16 mismatch"

    # Multi-block grid (bb < B): exercises the pipelined batch-block path.
    out_mb = tsmixer_forward(x, params, e_layers=e_layers, pred_len=pred_len,
                             batch_block=1, compute_dtype=jnp.float32)
    out_mb = jax.block_until_ready(out_mb)
    assert jnp.allclose(out_mb, ref, atol=1e-4, rtol=1e-4), "multi-block mismatch"

    print("KERNEL_OK")
</pallas_src>

<mosaic_0001>
module attributes {stable_mosaic.version = 11 : i64} {
  func.func @_tsmixer_kernel(%arg0: i32, %arg1: memref<16x16xf32, #tpu.memory_space<vmem>>, %arg2: memref<2x16x32xf32, #tpu.memory_space<vmem>>, %arg3: memref<2x1x32xf32, #tpu.memory_space<vmem>>, %arg4: memref<2x32x16xf32, #tpu.memory_space<vmem>>, %arg5: memref<2x1x16xf32, #tpu.memory_space<vmem>>, %arg6: memref<2x32x8xf32, #tpu.memory_space<vmem>>, %arg7: memref<2x32x1xf32, #tpu.memory_space<vmem>>, %arg8: memref<2x8x32xf32, #tpu.memory_space<vmem>>, %arg9: memref<2x8x1xf32, #tpu.memory_space<vmem>>, %arg10: memref<16x12xf32, #tpu.memory_space<vmem>>, %arg11: memref<1x12xf32, #tpu.memory_space<vmem>>, %arg12: memref<16x12xf32, #tpu.memory_space<vmem>>) attributes {dimension_semantics = [#tpu.dimension_semantics<parallel>], iteration_bounds = array<i64: 1>, scalar_prefetch = 0 : i64, scratch_operands = 0 : i64, tpu.core_type = #tpu.core_type<tc>, window_params = [{transform_indices = @transform_0, window_bounds = array<i64: 16, 16>}, {pipeline_mode = #tpu.pipeline_mode<synchronous>, transform_indices = @transform_1, window_bounds = array<i64: 2, 16, 32>}, {pipeline_mode = #tpu.pipeline_mode<synchronous>, transform_indices = @transform_2, window_bounds = array<i64: 2, 1, 32>}, {pipeline_mode = #tpu.pipeline_mode<synchronous>, transform_indices = @transform_3, window_bounds = array<i64: 2, 32, 16>}, {pipeline_mode = #tpu.pipeline_mode<synchronous>, transform_indices = @transform_4, window_bounds = array<i64: 2, 1, 16>}, {pipeline_mode = #tpu.pipeline_mode<synchronous>, transform_indices = @transform_5, window_bounds = array<i64: 2, 32, 8>}, {pipeline_mode = #tpu.pipeline_mode<synchronous>, transform_indices = @transform_6, window_bounds = array<i64: 2, 32, 1>}, {pipeline_mode = #tpu.pipeline_mode<synchronous>, transform_indices = @transform_7, window_bounds = array<i64: 2, 8, 32>}, {pipeline_mode = #tpu.pipeline_mode<synchronous>, transform_indices = @transform_8, window_bounds = array<i64: 2, 8, 1>}, {pipeline_mode = #tpu.pipeline_mode<synchronous>, transform_indices = @transform_9, window_bounds = array<i64: 16, 12>}, {pipeline_mode = #tpu.pipeline_mode<synchronous>, transform_indices = @transform_10, window_bounds = array<i64: 1, 12>}, {transform_indices = @transform_11, window_bounds = array<i64: 16, 12>}]} {
    %c0 = arith.constant 0 : index
    %c0_0 = arith.constant 0 : index
    %0 = vector.load %arg1[%c0, %c0_0] : memref<16x16xf32, #tpu.memory_space<vmem>>, vector<16x16xf32>
    %c0_1 = arith.constant 0 : index
    %c0_2 = arith.constant 0 : index
    %c0_3 = arith.constant 0 : index
    %1 = vector.load %arg2[%c0_1, %c0_2, %c0_3] : memref<2x16x32xf32, #tpu.memory_space<vmem>>, vector<1x16x32xf32>
    %2 = vector.shape_cast %1 : vector<1x16x32xf32> to vector<16x32xf32>
    %cst = arith.constant dense<0.000000e+00> : vector<16x32xf32>
    %3 = tpu.matmul %0, %2, %cst {dimension_numbers = #tpu.dot_dimension_numbers<[1], [0], [0], [1], [0, 0, 1, 1], [], []>} : vector<16x16xf32>, vector<16x32xf32>, vector<16x32xf32> -> vector<16x32xf32>
    %c0_4 = arith.constant 0 : index
    %c0_5 = arith.constant 0 : index
    %c0_6 = arith.constant 0 : index
    %4 = vector.load %arg3[%c0_4, %c0_5, %c0_6] : memref<2x1x32xf32, #tpu.memory_space<vmem>>, vector<1x1x32xf32>
    %5 = vector.shape_cast %4 : vector<1x1x32xf32> to vector<1x32xf32>
    %6 = vector.broadcast %5 : vector<1x32xf32> to vector<16x32xf32>
    %7 = arith.addf %3, %6 : vector<16x32xf32>
    %cst_7 = arith.constant 0.000000e+00 : f32
    %8 = vector.broadcast %cst_7 : f32 to vector<16x32xf32>
    %9 = arith.maximumf %7, %8 : vector<16x32xf32>
    %c0_8 = arith.constant 0 : index
    %c0_9 = arith.constant 0 : index
    %c0_10 = arith.constant 0 : index
    %10 = vector.load %arg4[%c0_8, %c0_9, %c0_10] : memref<2x32x16xf32, #tpu.memory_space<vmem>>, vector<1x32x16xf32>
    %11 = vector.shape_cast %10 : vector<1x32x16xf32> to vector<32x16xf32>
    %cst_11 = arith.constant dense<0.000000e+00> : vector<16x16xf32>
    %12 = tpu.matmul %9, %11, %cst_11 {dimension_numbers = #tpu.dot_dimension_numbers<[1], [0], [0], [1], [0, 0, 1, 1], [], []>} : vector<16x32xf32>, vector<32x16xf32>, vector<16x16xf32> -> vector<16x16xf32>
    %c0_12 = arith.constant 0 : index
    %c0_13 = arith.constant 0 : index
    %c0_14 = arith.constant 0 : index
    %13 = vector.load %arg5[%c0_12, %c0_13, %c0_14] : memref<2x1x16xf32, #tpu.memory_space<vmem>>, vector<1x1x16xf32>
    %14 = vector.shape_cast %13 : vector<1x1x16xf32> to vector<1x16xf32>
    %15 = vector.broadcast %14 : vector<1x16xf32> to vector<16x16xf32>
    %16 = arith.addf %12, %15 : vector<16x16xf32>
    %17 = arith.addf %0, %16 : vector<16x16xf32>
    %c0_15 = arith.constant 0 : index
    %c0_16 = arith.constant 0 : index
    %c0_17 = arith.constant 0 : index
    %18 = vector.load %arg6[%c0_15, %c0_16, %c0_17] : memref<2x32x8xf32, #tpu.memory_space<vmem>>, vector<1x32x8xf32>
    %19 = vector.shape_cast %18 : vector<1x32x8xf32> to vector<32x8xf32>
    %c0_18 = arith.constant 0 : index
    %c0_19 = arith.constant 0 : index
    %c0_20 = arith.constant 0 : index
    %20 = vector.load %arg8[%c0_18, %c0_19, %c0_20] : memref<2x8x32xf32, #tpu.memory_space<vmem>>, vector<1x8x32xf32>
    %21 = vector.shape_cast %20 : vector<1x8x32xf32> to vector<8x32xf32>
    %c0_21 = arith.constant 0 : index
    %c0_22 = arith.constant 0 : index
    %c0_23 = arith.constant 0 : index
    %22 = vector.load %arg7[%c0_21, %c0_22, %c0_23] : memref<2x32x1xf32, #tpu.memory_space<vmem>>, vector<1x32x1xf32>
    %23 = vector.shape_cast %22 : vector<1x32x1xf32> to vector<32x1xf32>
    %24 = vector.shape_cast %23 : vector<32x1xf32> to vector<32x1xf32>
    %25 = vector.broadcast %24 : vector<32x1xf32> to vector<32x16xf32>
    %c0_24 = arith.constant 0 : index
    %c0_25 = arith.constant 0 : index
    %c0_26 = arith.constant 0 : index
    %26 = vector.load %arg9[%c0_24, %c0_25, %c0_26] : memref<2x8x1xf32, #tpu.memory_space<vmem>>, vector<1x8x1xf32>
    %27 = vector.shape_cast %26 : vector<1x8x1xf32> to vector<8x1xf32>
    %28 = vector.shape_cast %27 : vector<8x1xf32> to vector<8x1xf32>
    %29 = vector.broadcast %28 : vector<8x1xf32> to vector<8x16xf32>
    %30 = vector.extract_strided_slice %17 {offsets = [0, 0], sizes = [8, 16], strides = [1, 1]} : vector<16x16xf32> to vector<8x16xf32>
    %cst_27 = arith.constant dense<0.000000e+00> : vector<32x16xf32>
    %31 = tpu.matmul %19, %30, %cst_27 {dimension_numbers = #tpu.dot_dimension_numbers<[1], [0], [0], [1], [0, 0, 1, 1], [], []>} : vector<32x8xf32>, vector<8x16xf32>, vector<32x16xf32> -> vector<32x16xf32>
    %32 = arith.addf %31, %25 : vector<32x16xf32>
    %cst_28 = arith.constant 0.000000e+00 : f32
    %33 = vector.broadcast %cst_28 : f32 to vector<32x16xf32>
    %34 = arith.maximumf %32, %33 : vector<32x16xf32>
    %cst_29 = arith.constant dense<0.000000e+00> : vector<8x16xf32>
    %35 = tpu.matmul %21, %34, %cst_29 {dimension_numbers = #tpu.dot_dimension_numbers<[1], [0], [0], [1], [0, 0, 1, 1], [], []>} : vector<8x32xf32>, vector<32x16xf32>, vector<8x16xf32> -> vector<8x16xf32>
    %36 = arith.addf %35, %29 : vector<8x16xf32>
    %37 = vector.extract_strided_slice %17 {offsets = [8, 0], sizes = [8, 16], strides = [1, 1]} : vector<16x16xf32> to vector<8x16xf32>
    %cst_30 = arith.constant dense<0.000000e+00> : vector<32x16xf32>
    %38 = tpu.matmul %19, %37, %cst_30 {dimension_numbers = #tpu.dot_dimension_numbers<[1], [0], [0], [1], [0, 0, 1, 1], [], []>} : vector<32x8xf32>, vector<8x16xf32>, vector<32x16xf32> -> vector<32x16xf32>
    %39 = arith.addf %38, %25 : vector<32x16xf32>
    %cst_31 = arith.constant 0.000000e+00 : f32
    %40 = vector.broadcast %cst_31 : f32 to vector<32x16xf32>
    %41 = arith.maximumf %39, %40 : vector<32x16xf32>
    %cst_32 = arith.constant dense<0.000000e+00> : vector<8x16xf32>
    %42 = tpu.matmul %21, %41, %cst_32 {dimension_numbers = #tpu.dot_dimension_numbers<[1], [0], [0], [1], [0, 0, 1, 1], [], []>} : vector<8x32xf32>, vector<32x16xf32>, vector<8x16xf32> -> vector<8x16xf32>
    %43 = arith.addf %42, %29 : vector<8x16xf32>
    %44 = tpu.concatenate %36, %43 in 0 : vector<8x16xf32>, vector<8x16xf32> -> vector<16x16xf32>
    %45 = arith.addf %17, %44 : vector<16x16xf32>
    %c1 = arith.constant 1 : index
    %c0_33 = arith.constant 0 : index
    %c0_34 = arith.constant 0 : index
    %46 = vector.load %arg2[%c1, %c0_33, %c0_34] : memref<2x16x32xf32, #tpu.memory_space<vmem>>, vector<1x16x32xf32>
    %47 = vector.shape_cast %46 : vector<1x16x32xf32> to vector<16x32xf32>
    %cst_35 = arith.constant dense<0.000000e+00> : vector<16x32xf32>
    %48 = tpu.matmul %45, %47, %cst_35 {dimension_numbers = #tpu.dot_dimension_numbers<[1], [0], [0], [1], [0, 0, 1, 1], [], []>} : vector<16x16xf32>, vector<16x32xf32>, vector<16x32xf32> -> vector<16x32xf32>
    %c1_36 = arith.constant 1 : index
    %c0_37 = arith.constant 0 : index
    %c0_38 = arith.constant 0 : index
    %49 = vector.load %arg3[%c1_36, %c0_37, %c0_38] : memref<2x1x32xf32, #tpu.memory_space<vmem>>, vector<1x1x32xf32>
    %50 = vector.shape_cast %49 : vector<1x1x32xf32> to vector<1x32xf32>
    %51 = vector.broadcast %50 : vector<1x32xf32> to vector<16x32xf32>
    %52 = arith.addf %48, %51 : vector<16x32xf32>
    %cst_39 = arith.constant 0.000000e+00 : f32
    %53 = vector.broadcast %cst_39 : f32 to vector<16x32xf32>
    %54 = arith.maximumf %52, %53 : vector<16x32xf32>
    %c1_40 = arith.constant 1 : index
    %c0_41 = arith.constant 0 : index
    %c0_42 = arith.constant 0 : index
    %55 = vector.load %arg4[%c1_40, %c0_41, %c0_42] : memref<2x32x16xf32, #tpu.memory_space<vmem>>, vector<1x32x16xf32>
    %56 = vector.shape_cast %55 : vector<1x32x16xf32> to vector<32x16xf32>
    %cst_43 = arith.constant dense<0.000000e+00> : vector<16x16xf32>
    %57 = tpu.matmul %54, %56, %cst_43 {dimension_numbers = #tpu.dot_dimension_numbers<[1], [0], [0], [1], [0, 0, 1, 1], [], []>} : vector<16x32xf32>, vector<32x16xf32>, vector<16x16xf32> -> vector<16x16xf32>
    %c1_44 = arith.constant 1 : index
    %c0_45 = arith.constant 0 : index
    %c0_46 = arith.constant 0 : index
    %58 = vector.load %arg5[%c1_44, %c0_45, %c0_46] : memref<2x1x16xf32, #tpu.memory_space<vmem>>, vector<1x1x16xf32>
    %59 = vector.shape_cast %58 : vector<1x1x16xf32> to vector<1x16xf32>
    %60 = vector.broadcast %59 : vector<1x16xf32> to vector<16x16xf32>
    %61 = arith.addf %57, %60 : vector<16x16xf32>
    %62 = arith.addf %45, %61 : vector<16x16xf32>
    %c1_47 = arith.constant 1 : index
    %c0_48 = arith.constant 0 : index
    %c0_49 = arith.constant 0 : index
    %63 = vector.load %arg6[%c1_47, %c0_48, %c0_49] : memref<2x32x8xf32, #tpu.memory_space<vmem>>, vector<1x32x8xf32>
    %64 = vector.shape_cast %63 : vector<1x32x8xf32> to vector<32x8xf32>
    %c1_50 = arith.constant 1 : index
    %c0_51 = arith.constant 0 : index
    %c0_52 = arith.constant 0 : index
    %65 = vector.load %arg8[%c1_50, %c0_51, %c0_52] : memref<2x8x32xf32, #tpu.memory_space<vmem>>, vector<1x8x32xf32>
    %66 = vector.shape_cast %65 : vector<1x8x32xf32> to vector<8x32xf32>
    %c1_53 = arith.constant 1 : index
    %c0_54 = arith.constant 0 : index
    %c0_55 = arith.constant 0 : index
    %67 = vector.load %arg7[%c1_53, %c0_54, %c0_55] : memref<2x32x1xf32, #tpu.memory_space<vmem>>, vector<1x32x1xf32>
    %68 = vector.shape_cast %67 : vector<1x32x1xf32> to vector<32x1xf32>
    %69 = vector.shape_cast %68 : vector<32x1xf32> to vector<32x1xf32>
    %70 = vector.broadcast %69 : vector<32x1xf32> to vector<32x16xf32>
    %c1_56 = arith.constant 1 : index
    %c0_57 = arith.constant 0 : index
    %c0_58 = arith.constant 0 : index
    %71 = vector.load %arg9[%c1_56, %c0_57, %c0_58] : memref<2x8x1xf32, #tpu.memory_space<vmem>>, vector<1x8x1xf32>
    %72 = vector.shape_cast %71 : vector<1x8x1xf32> to vector<8x1xf32>
    %73 = vector.shape_cast %72 : vector<8x1xf32> to vector<8x1xf32>
    %74 = vector.broadcast %73 : vector<8x1xf32> to vector<8x16xf32>
    %75 = vector.extract_strided_slice %62 {offsets = [0, 0], sizes = [8, 16], strides = [1, 1]} : vector<16x16xf32> to vector<8x16xf32>
    %cst_59 = arith.constant dense<0.000000e+00> : vector<32x16xf32>
    %76 = tpu.matmul %64, %75, %cst_59 {dimension_numbers = #tpu.dot_dimension_numbers<[1], [0], [0], [1], [0, 0, 1, 1], [], []>} : vector<32x8xf32>, vector<8x16xf32>, vector<32x16xf32> -> vector<32x16xf32>
    %77 = arith.addf %76, %70 : vector<32x16xf32>
    %cst_60 = arith.constant 0.000000e+00 : f32
    %78 = vector.broadcast %cst_60 : f32 to vector<32x16xf32>
    %79 = arith.maximumf %77, %78 : vector<32x16xf32>
    %cst_61 = arith.constant dense<0.000000e+00> : vector<8x16xf32>
    %80 = tpu.matmul %66, %79, %cst_61 {dimension_numbers = #tpu.dot_dimension_numbers<[1], [0], [0], [1], [0, 0, 1, 1], [], []>} : vector<8x32xf32>, vector<32x16xf32>, vector<8x16xf32> -> vector<8x16xf32>
    %81 = arith.addf %80, %74 : vector<8x16xf32>
    %82 = vector.extract_strided_slice %62 {offsets = [8, 0], sizes = [8, 16], strides = [1, 1]} : vector<16x16xf32> to vector<8x16xf32>
    %cst_62 = arith.constant dense<0.000000e+00> : vector<32x16xf32>
    %83 = tpu.matmul %64, %82, %cst_62 {dimension_numbers = #tpu.dot_dimension_numbers<[1], [0], [0], [1], [0, 0, 1, 1], [], []>} : vector<32x8xf32>, vector<8x16xf32>, vector<32x16xf32> -> vector<32x16xf32>
    %84 = arith.addf %83, %70 : vector<32x16xf32>
    %cst_63 = arith.constant 0.000000e+00 : f32
    %85 = vector.broadcast %cst_63 : f32 to vector<32x16xf32>
    %86 = arith.maximumf %84, %85 : vector<32x16xf32>
    %cst_64 = arith.constant dense<0.000000e+00> : vector<8x16xf32>
    %87 = tpu.matmul %66, %86, %cst_64 {dimension_numbers = #tpu.dot_dimension_numbers<[1], [0], [0], [1], [0, 0, 1, 1], [], []>} : vector<8x32xf32>, vector<32x16xf32>, vector<8x16xf32> -> vector<8x16xf32>
    %88 = arith.addf %87, %74 : vector<8x16xf32>
    %89 = tpu.concatenate %81, %88 in 0 : vector<8x16xf32>, vector<8x16xf32> -> vector<16x16xf32>
    %90 = arith.addf %62, %89 : vector<16x16xf32>
    %c0_65 = arith.constant 0 : index
    %c0_66 = arith.constant 0 : index
    %91 = vector.load %arg10[%c0_65, %c0_66] : memref<16x12xf32, #tpu.memory_space<vmem>>, vector<16x12xf32>
    %cst_67 = arith.constant dense<0.000000e+00> : vector<16x12xf32>
    %92 = tpu.matmul %90, %91, %cst_67 {dimension_numbers = #tpu.dot_dimension_numbers<[1], [0], [0], [1], [0, 0, 1, 1], [], []>} : vector<16x16xf32>, vector<16x12xf32>, vector<16x12xf32> -> vector<16x12xf32>
    %c0_68 = arith.constant 0 : index
    %c0_69 = arith.constant 0 : index
    %93 = vector.load %arg11[%c0_68, %c0_69] : memref<1x12xf32, #tpu.memory_space<vmem>>, vector<1x12xf32>
    %94 = vector.broadcast %93 : vector<1x12xf32> to vector<16x12xf32>
    %95 = arith.addf %92, %94 : vector<16x12xf32>
    %c0_70 = arith.constant 0 : index
    %c0_71 = arith.constant 0 : index
    %96 = vector.load %arg12[%c0_70, %c0_71] : memref<16x12xf32, #tpu.memory_space<vmem>>, vector<16x12xf32>
    tpu.vector_store %arg12[%c0_70, %c0_71], %95 {strides = array<i32>} : memref<16x12xf32, #tpu.memory_space<vmem>>, vector<16x12xf32>,
    return
  }
  func.func @transform_0(%arg0: i32) -> (i32, i32) {
    %c0_i32 = arith.constant 0 : i32
    %c0_i32_0 = arith.constant 0 : i32
    return %arg0, %c0_i32 : i32, i32
  }
  func.func @transform_1(%arg0: i32) -> (i32, i32, i32) {
    %c0_i32 = arith.constant 0 : i32
    %c0_i32_0 = arith.constant 0 : i32
    %c0_i32_1 = arith.constant 0 : i32
    %c0_i32_2 = arith.constant 0 : i32
    return %c0_i32, %c0_i32_0, %c0_i32_1 : i32, i32, i32
  }
  func.func @transform_2(%arg0: i32) -> (i32, i32, i32) {
    %c0_i32 = arith.constant 0 : i32
    %c0_i32_0 = arith.constant 0 : i32
    %c0_i32_1 = arith.constant 0 : i32
    %c0_i32_2 = arith.constant 0 : i32
    return %c0_i32, %c0_i32_0, %c0_i32_1 : i32, i32, i32
  }
  func.func @transform_3(%arg0: i32) -> (i32, i32, i32) {
    %c0_i32 = arith.constant 0 : i32
    %c0_i32_0 = arith.constant 0 : i32
    %c0_i32_1 = arith.constant 0 : i32
    %c0_i32_2 = arith.constant 0 : i32
    return %c0_i32, %c0_i32_0, %c0_i32_1 : i32, i32, i32
  }
  func.func @transform_4(%arg0: i32) -> (i32, i32, i32) {
    %c0_i32 = arith.constant 0 : i32
    %c0_i32_0 = arith.constant 0 : i32
    %c0_i32_1 = arith.constant 0 : i32
    %c0_i32_2 = arith.constant 0 : i32
    return %c0_i32, %c0_i32_0, %c0_i32_1 : i32, i32, i32
  }
  func.func @transform_5(%arg0: i32) -> (i32, i32, i32) {
    %c0_i32 = arith.constant 0 : i32
    %c0_i32_0 = arith.constant 0 : i32
    %c0_i32_1 = arith.constant 0 : i32
    %c0_i32_2 = arith.constant 0 : i32
    return %c0_i32, %c0_i32_0, %c0_i32_1 : i32, i32, i32
  }
  func.func @transform_6(%arg0: i32) -> (i32, i32, i32) {
    %c0_i32 = arith.constant 0 : i32
    %c0_i32_0 = arith.constant 0 : i32
    %c0_i32_1 = arith.constant 0 : i32
    %c0_i32_2 = arith.constant 0 : i32
    return %c0_i32, %c0_i32_0, %c0_i32_1 : i32, i32, i32
  }
  func.func @transform_7(%arg0: i32) -> (i32, i32, i32) {
    %c0_i32 = arith.constant 0 : i32
    %c0_i32_0 = arith.constant 0 : i32
    %c0_i32_1 = arith.constant 0 : i32
    %c0_i32_2 = arith.constant 0 : i32
    return %c0_i32, %c0_i32_0, %c0_i32_1 : i32, i32, i32
  }
  func.func @transform_8(%arg0: i32) -> (i32, i32, i32) {
    %c0_i32 = arith.constant 0 : i32
    %c0_i32_0 = arith.constant 0 : i32
    %c0_i32_1 = arith.constant 0 : i32
    %c0_i32_2 = arith.constant 0 : i32
    return %c0_i32, %c0_i32_0, %c0_i32_1 : i32, i32, i32
  }
  func.func @transform_9(%arg0: i32) -> (i32, i32) {
    %c0_i32 = arith.constant 0 : i32
    %c0_i32_0 = arith.constant 0 : i32
    %c0_i32_1 = arith.constant 0 : i32
    return %c0_i32, %c0_i32_0 : i32, i32
  }
  func.func @transform_10(%arg0: i32) -> (i32, i32) {
    %c0_i32 = arith.constant 0 : i32
    %c0_i32_0 = arith.constant 0 : i32
    %c0_i32_1 = arith.constant 0 : i32
    return %c0_i32, %c0_i32_0 : i32, i32
  }
  func.func @transform_11(%arg0: i32) -> (i32, i32) {
    %c0_i32 = arith.constant 0 : i32
    %c0_i32_0 = arith.constant 0 : i32
    return %arg0, %c0_i32 : i32, i32
  }
}

</mosaic_0001>

<llo_original>
// kernel: tpu_custom_call.1
$region0: #{tpu_custom_call.1}
  #allocation0 [shape = 'u32[]', space=smem, size = 0x4, offset = 0x4, fixed_abs, tag = 'smem constant byte address 0x4 - core index']
  #allocation1 [shape = 'u32[144,128]{1,0:T(1,128)}', space=vmem, size = 0x12000, scoped, tag = 'internal scratch']
  %s0 = inlined_call_operand.vmem [shape: f32[16,16], index: 0, kind: input, shape index: {}]
  %s1 = inlined_call_operand.vmem [shape: f32[2,16,32], index: 1, kind: input, shape index: {}]
  %s2 = inlined_call_operand.vmem [shape: f32[2,1,32], index: 2, kind: input, shape index: {}]
  %s3 = inlined_call_operand.vmem [shape: f32[2,32,16], index: 3, kind: input, shape index: {}]
  %s4 = inlined_call_operand.vmem [shape: f32[2,1,16], index: 4, kind: input, shape index: {}]
  %s5 = inlined_call_operand.vmem [shape: f32[2,32,8], index: 5, kind: input, shape index: {}]
  %s6 = inlined_call_operand.vmem [shape: f32[2,32,1], index: 6, kind: input, shape index: {}]
  %s7 = inlined_call_operand.vmem [shape: f32[2,8,32], index: 7, kind: input, shape index: {}]
  %s8 = inlined_call_operand.vmem [shape: f32[2,8,1], index: 8, kind: input, shape index: {}]
  %s9 = inlined_call_operand.vmem [shape: f32[16,12], index: 9, kind: input, shape index: {}]
  %s10 = inlined_call_operand.vmem [shape: f32[1,12], index: 10, kind: input, shape index: {}]
  %s11 = inlined_call_operand.hbm [shape: f32[16,12], index: 11, kind: output, shape index: {}]
  %s12 = sld [smem:[#allocation0]]
  $region54: #{tpu_custom_call.1} parent=0
    _
  %s14 = ssub.s32 1, %s12
  %s15 = scalar_select 0, %s14, %s12
  $region1: #{tpu_custom_call.1} parent=0
    #allocation2 [shape = 'u8[8192]{0}', space=vmem, size = 0x2000, scoped, tag = 'output window, operand 0, single buffered']
    #allocation3 [shape = 's32[1]{0}', space=sflag, size = 0x4, scoped, tag = 'scoped memory for tpu_custom_call.1']
    %16 = vsyncpa [#allocation3], 0
    // Predicated region
    $region2: #{tpu_custom_call.1} parent=1 // pred_check
      _
    $region3: #{tpu_custom_call.1} parent=1 // pred_check_branch
      %18 = sbr.rel (0) target = $region5
    $region4: #{tpu_custom_call.1} parent=1 // pred_region
      _
    $region5: #{tpu_custom_call.1} parent=1 // pred_fallthru
      _
    // Predicated region
    $region6: #{tpu_custom_call.1} parent=1 // pred_check
      _
    $region7: #{tpu_custom_call.1} parent=1 // pred_check_branch
      %20 = sbr.rel (0) target = $region9
    $region8: #{tpu_custom_call.1} parent=1 // pred_region
      _
    $region9: #{tpu_custom_call.1} parent=1 // pred_fallthru
      _
    // Predicated region
    $region10: #{tpu_custom_call.1} parent=1 // pred_check
      _
    $region11: #{tpu_custom_call.1} parent=1 // pred_check_branch
      %22 = sbr.rel (0) target = $region13
    $region12: #{tpu_custom_call.1} parent=1 // pred_region
      _
    $region13: #{tpu_custom_call.1} parent=1 // pred_fallthru
      _
    // Predicated region
    $region14: #{tpu_custom_call.1} parent=1 // pred_check
      _
    $region15: #{tpu_custom_call.1} parent=1 // pred_check_branch
      %24 = sbr.rel (0) target = $region17
    $region16: #{tpu_custom_call.1} parent=1 // pred_region
      _
    $region17: #{tpu_custom_call.1} parent=1 // pred_fallthru
      _
    // Predicated region
    $region18: #{tpu_custom_call.1} parent=1 // pred_check
      _
    $region19: #{tpu_custom_call.1} parent=1 // pred_check_branch
      %26 = sbr.rel (0) target = $region21
    $region20: #{tpu_custom_call.1} parent=1 // pred_region
      _
    $region21: #{tpu_custom_call.1} parent=1 // pred_fallthru
      _
    // Predicated region
    $region22: #{tpu_custom_call.1} parent=1 // pred_check
      _
    $region23: #{tpu_custom_call.1} parent=1 // pred_check_branch
      %28 = sbr.rel (0) target = $region25
    $region24: #{tpu_custom_call.1} parent=1 // pred_region
      _
    $region25: #{tpu_custom_call.1} parent=1 // pred_fallthru
      _
    // Predicated region
    $region26: #{tpu_custom_call.1} parent=1 // pred_check
      _
    $region27: #{tpu_custom_call.1} parent=1 // pred_check_branch
      %30 = sbr.rel (0) target = $region29
    $region28: #{tpu_custom_call.1} parent=1 // pred_region
      _
    $region29: #{tpu_custom_call.1} parent=1 // pred_fallthru
      _
    // Predicated region
    $region30: #{tpu_custom_call.1} parent=1 // pred_check
      _
    $region31: #{tpu_custom_call.1} parent=1 // pred_check_branch
      %32 = sbr.rel (0) target = $region33
    $region32: #{tpu_custom_call.1} parent=1 // pred_region
      _
    $region33: #{tpu_custom_call.1} parent=1 // pred_fallthru
      _
    // Predicated region
    $region34: #{tpu_custom_call.1} parent=1 // pred_check
      _
    $region35: #{tpu_custom_call.1} parent=1 // pred_check_branch
      %34 = sbr.rel (0) target = $region37
    $region36: #{tpu_custom_call.1} parent=1 // pred_region
      _
    $region37: #{tpu_custom_call.1} parent=1 // pred_fallthru
      _
    // Predicated region
    $region38: #{tpu_custom_call.1} parent=1 // pred_check
      _
    $region39: #{tpu_custom_call.1} parent=1 // pred_check_branch
      %36 = sbr.rel (0) target = $region41
    $region40: #{tpu_custom_call.1} parent=1 // pred_region
      _
    $region41: #{tpu_custom_call.1} parent=1 // pred_fallthru
      _
    // Predicated region
    $region42: #{tpu_custom_call.1} parent=1 // pred_check
      _
    $region43: #{tpu_custom_call.1} parent=1 // pred_check_branch
      %38 = sbr.rel (0) target = $region45
    $region44: #{tpu_custom_call.1} parent=1 // pred_region
      _
    $region45: #{tpu_custom_call.1} parent=1 // pred_fallthru
      _
    %v39 = vld [vmem:[%s0] sm:$0xff]
    %v40 = vld [vmem:[%s0 + $0x8] sm:$0xff]
    %v41 = vld [vmem:[%s1] sm:$0xff]
    %v42 = vld [vmem:[%s1 + $0x8] sm:$0xff]
    %v43 = vld [vmem:[%s2] sm:$0x1]
    %v45 = vlaneseq
    %v46 = vshrl.u32 %v45, 7
    %v47 = vsub.s32 0, %v46
    %v48 = vrot.slane %v43, %v47
    %vm50 = vcmask 130048
    %v52 = vsel %vm50, %v39, 0
    %v55 = vsel %vm50, %v40, 0
    %57 = vmatprep.subr.mxu0 0.0
    %58 = vmatpush1.msra.mxu0 %v41
    %59 = vmatprep.subr.mxu0 0.0
    %60 = vmatpush1.msra.mxu0 %v42
    %61 = vmatprep.subr.mxu0 0.0
    %62 = vmatpush1.msra.mxu0 0.0
    %63 = vmatprep.subr.mxu0 0.0
    %64 = vmatpush1.msra.mxu0 0.0
    %65 = vmatprep.subr.mxu0 0.0
    %66 = vmatpush1.msra.mxu0 0.0
    %67 = vmatprep.subr.mxu0 0.0
    %68 = vmatpush1.msra.mxu0 0.0
    %69 = vmatprep.subr.mxu0 0.0
    %70 = vmatpush1.msra.mxu0 0.0
    %71 = vmatprep.subr.mxu0 0.0
    %72 = vmatpush1.msra.mxu0 0.0
    %73 = vmatprep.subr.mxu0 0.0
    %74 = vmatpush1.msra.mxu0 0.0
    %75 = vmatprep.subr.mxu0 0.0
    %76 = vmatpush1.msra.mxu0 0.0
    %77 = vmatprep.subr.mxu0 0.0
    %78 = vmatpush1.msra.mxu0 0.0
    %79 = vmatprep.subr.mxu0 0.0
    %80 = vmatpush1.msra.mxu0 0.0
    %81 = vmatprep.subr.mxu0 0.0
    %82 = vmatpush1.msra.mxu0 0.0
    %83 = vmatprep.subr.mxu0 0.0
    %84 = vmatpush1.msra.mxu0 0.0
    %85 = vmatprep.subr.mxu0 0.0
    %86 = vmatpush1.msra.mxu0 0.0
    %87 = vmatprep.subr.mxu0 0.0
    %88 = vmatpush1.msra.mxu0 0.0
    %89 = vmatprep.subr.mxu0 0.0
    %90 = vmatpush1.msra.mxu0 0.0
    %91 = vmatprep.subr.mxu0 0.0
    %92 = vmatpush1.msra.mxu0 0.0
    %93 = vmatprep.subr.mxu0 0.0
    %94 = vmatpush1.msra.mxu0 0.0
    %95 = vmatprep.subr.mxu0 0.0
    %96 = vmatpush1.msra.mxu0 0.0
    %97 = vmatprep.subr.mxu0 0.0
    %98 = vmatpush1.msra.mxu0 0.0
    %99 = vmatprep.subr.mxu0 0.0
    %100 = vmatpush1.msra.mxu0 0.0
    %101 = vmatprep.subr.mxu0 0.0
    %102 = vmatpush1.msra.mxu0 0.0
    %103 = vmatprep.subr.mxu0 0.0
    %104 = vmatpush1.msra.mxu0 0.0
    %105 = vmatprep.subr.mxu0 0.0
    %106 = vmatpush1.msra.mxu0 0.0
    %107 = vmatprep.subr.mxu0 0.0
    %108 = vmatpush1.msra.mxu0 0.0
    %109 = vmatprep.subr.mxu0 0.0
    %110 = vmatpush1.msra.mxu0 0.0
    %111 = vmatprep.subr.mxu0 0.0
    %112 = vmatpush1.msra.mxu0 0.0
    %113 = vmatprep.subr.mxu0 0.0
    %114 = vmatpush1.msra.mxu0 0.0
    %115 = vmatprep.subr.mxu0 0.0
    %116 = vmatpush1.msra.mxu0 0.0
    %117 = vmatprep.subr.mxu0 0.0
    %118 = vmatpush1.msra.mxu0 0.0
    %119 = vmatprep.subr.mxu0 0.0
    %120 = vmatpush1.msra.mxu0 0.0
    %121 = vmatprep.mubr.f32.mxu0 0.0
    %122 = vmatmul.mubr.f32.gmra.mrb[0].mxu0 %v52
    %v123 = vpop.f32.mrb[0].mxu0
    %v124 = vadd.f32 %v48, %v123
    %v125 = vpop.f32.mrb[0].mxu0
    %126 = vmatprep.mubr.f32.mxu0 0.0
    %127 = vmatmul.mubr.f32.gmra.mrb[0].mxu0 %v55
    %v128 = vpop.f32.mrb[0].mxu0
    %v129 = vadd.f32 %v48, %v128
    %v130 = vpop.f32.mrb[0].mxu0
    %131 = vdwg.mxu0
    %v132 = vmax.f32 %v124, 0.0
    %v133 = vmax.f32 %v129, 0.0
    %v134 = vld [vmem:[%s3] sm:$0xff]
    %v135 = vld [vmem:[%s3 + $0x8] sm:$0xff]
    %v136 = vld [vmem:[%s3 + $0x10] sm:$0xff]
    %v137 = vld [vmem:[%s3 + $0x18] sm:$0xff]
    %v138 = vld [vmem:[%s4] sm:$0x1]
    %v140 = vlaneseq
    %v141 = vshrl.u32 %v140, 7
    %v142 = vsub.s32 0, %v141
    %v143 = vrot.slane %v138, %v142
    %vm145 = vcmask 261120
    %v147 = vsel %vm145, %v132, 0
    %v150 = vsel %vm145, %v133, 0
    %152 = vmatprep.subr.mxu0 0.0
    %153 = vmatpush1.msra.mxu0 %v134
    %154 = vmatprep.subr.mxu0 0.0
    %155 = vmatpush1.msra.mxu0 %v135
    %156 = vmatprep.subr.mxu0 0.0
    %157 = vmatpush1.msra.mxu0 %v136
    %158 = vmatprep.subr.mxu0 0.0
    %159 = vmatpush1.msra.mxu0 %v137
    %160 = vmatprep.subr.mxu0 0.0
    %161 = vmatpush1.msra.mxu0 0.0
    %162 = vmatprep.subr.mxu0 0.0
    %163 = vmatpush1.msra.mxu0 0.0
    %164 = vmatprep.subr.mxu0 0.0
    %165 = vmatpush1.msra.mxu0 0.0
    %166 = vmatprep.subr.mxu0 0.0
    %167 = vmatpush1.msra.mxu0 0.0
    %168 = vmatprep.subr.mxu0 0.0
    %169 = vmatpush1.msra.mxu0 0.0
    %170 = vmatprep.subr.mxu0 0.0
    %171 = vmatpush1.msra.mxu0 0.0
    %172 = vmatprep.subr.mxu0 0.0
    %173 = vmatpush1.msra.mxu0 0.0
    %174 = vmatprep.subr.mxu0 0.0
    %175 = vmatpush1.msra.mxu0 0.0
    %176 = vmatprep.subr.mxu0 0.0
    %177 = vmatpush1.msra.mxu0 0.0
    %178 = vmatprep.subr.mxu0 0.0
    %179 = vmatpush1.msra.mxu0 0.0
    %180 = vmatprep.subr.mxu0 0.0
    %181 = vmatpush1.msra.mxu0 0.0
    %182 = vmatprep.subr.mxu0 0.0
    %183 = vmatpush1.msra.mxu0 0.0
    %184 = vmatprep.subr.mxu0 0.0
    %185 = vmatpush1.msra.mxu0 0.0
    %186 = vmatprep.subr.mxu0 0.0
    %187 = vmatpush1.msra.mxu0 0.0
    %188 = vmatprep.subr.mxu0 0.0
    %189 = vmatpush1.msra.mxu0 0.0
    %190 = vmatprep.subr.mxu0 0.0
    %191 = vmatpush1.msra.mxu0 0.0
    %192 = vmatprep.subr.mxu0 0.0
    %193 = vmatpush1.msra.mxu0 0.0
    %194 = vmatprep.subr.mxu0 0.0
    %195 = vmatpush1.msra.mxu0 0.0
    %196 = vmatprep.subr.mxu0 0.0
    %197 = vmatpush1.msra.mxu0 0.0
    %198 = vmatprep.subr.mxu0 0.0
    %199 = vmatpush1.msra.mxu0 0.0
    %200 = vmatprep.subr.mxu0 0.0
    %201 = vmatpush1.msra.mxu0 0.0
    %202 = vmatprep.subr.mxu0 0.0
    %203 = vmatpush1.msra.mxu0 0.0
    %204 = vmatprep.subr.mxu0 0.0
    %205 = vmatpush1.msra.mxu0 0.0
    %206 = vmatprep.subr.mxu0 0.0
    %207 = vmatpush1.msra.mxu0 0.0
    %208 = vmatprep.subr.mxu0 0.0
    %209 = vmatpush1.msra.mxu0 0.0
    %210 = vmatprep.subr.mxu0 0.0
    %211 = vmatpush1.msra.mxu0 0.0
    %212 = vmatprep.subr.mxu0 0.0
    %213 = vmatpush1.msra.mxu0 0.0
    %214 = vmatprep.subr.mxu0 0.0
    %215 = vmatpush1.msra.mxu0 0.0
    %216 = vmatprep.mubr.f32.mxu0 0.0
    %217 = vmatmul.mubr.f32.gmra.mrb[0].mxu0 %v147
    %v218 = vpop.f32.mrb[0].mxu0
    %v219 = vadd.f32 %v143, %v218
    %v220 = vpop.f32.mrb[0].mxu0
    %221 = vmatprep.mubr.f32.mxu0 0.0
    %222 = vmatmul.mubr.f32.gmra.mrb[0].mxu0 %v150
    %v223 = vpop.f32.mrb[0].mxu0
    %v224 = vadd.f32 %v143, %v223
    %v225 = vpop.f32.mrb[0].mxu0
    %226 = vdwg.mxu0
    %v227 = vadd.f32 %v39, %v219
    %v228 = vadd.f32 %v40, %v224
    %v229 = vld [vmem:[%s5] sm:$0xff]
    %v230 = vld [vmem:[%s5 + $0x8] sm:$0xff]
    %v231 = vld [vmem:[%s5 + $0x10] sm:$0xff]
    %v232 = vld [vmem:[%s5 + $0x18] sm:$0xff]
    %v233 = vld [vmem:[%s7] sm:$0xff]
    %v234 = vld [vmem:[%s6] sm:$0xff]
    %v235 = vld [vmem:[%s6 + $0x8] sm:$0xff]
    %v236 = vld [vmem:[%s6 + $0x10] sm:$0xff]
    %v237 = vld [vmem:[%s6 + $0x18] sm:$0xff]
    %239 = vset.pattern.permute.xlu0 0
    %240 = vperm.xlu0 %239, %v234
    %v241 = vpop.permute.xlu0 %240
    %244 = vset.pattern.permute.xlu0 0
    %245 = vperm.xlu0 %244, %v235
    %v246 = vpop.permute.xlu0 %245
    %249 = vset.pattern.permute.xlu0 0
    %250 = vperm.xlu0 %249, %v236
    %v251 = vpop.permute.xlu0 %250
    %254 = vset.pattern.permute.xlu0 0
    %255 = vperm.xlu0 %254, %v237
    %v256 = vpop.permute.xlu0 %255
    %v258 = vld [vmem:[%s8] sm:$0xff]
    %260 = vset.pattern.permute.xlu0 0
    %261 = vperm.xlu0 %260, %v258
    %v262 = vpop.permute.xlu0 %261
    %vm264 = vcmask 64512
    %v266 = vsel %vm264, %v229, 0
    %v269 = vsel %vm264, %v230, 0
    %v272 = vsel %vm264, %v231, 0
    %v275 = vsel %vm264, %v232, 0
    %277 = vmatprep.subr.mxu0 0.0
    %278 = vmatpush1.msra.mxu0 %v227
    %279 = vmatprep.subr.mxu0 0.0
    %280 = vmatpush1.msra.mxu0 0.0
    %281 = vmatprep.subr.mxu0 0.0
    %282 = vmatpush1.msra.mxu0 0.0
    %283 = vmatprep.subr.mxu0 0.0
    %284 = vmatpush1.msra.mxu0 0.0
    %285 = vmatprep.subr.mxu0 0.0
    %286 = vmatpush1.msra.mxu0 0.0
    %287 = vmatprep.subr.mxu0 0.0
    %288 = vmatpush1.msra.mxu0 0.0
    %289 = vmatprep.subr.mxu0 0.0
    %290 = vmatpush1.msra.mxu0 0.0
    %291 = vmatprep.subr.mxu0 0.0
    %292 = vmatpush1.msra.mxu0 0.0
    %293 = vmatprep.subr.mxu0 0.0
    %294 = vmatpush1.msra.mxu0 0.0
    %295 = vmatprep.subr.mxu0 0.0
    %296 = vmatpush1.msra.mxu0 0.0
    %297 = vmatprep.subr.mxu0 0.0
    %298 = vmatpush1.msra.mxu0 0.0
    %299 = vmatprep.subr.mxu0 0.0
    %300 = vmatpush1.msra.mxu0 0.0
    %301 = vmatprep.subr.mxu0 0.0
    %302 = vmatpush1.msra.mxu0 0.0
    %303 = vmatprep.subr.mxu0 0.0
    %304 = vmatpush1.msra.mxu0 0.0
    %305 = vmatprep.subr.mxu0 0.0
    %306 = vmatpush1.msra.mxu0 0.0
    %307 = vmatprep.subr.mxu0 0.0
    %308 = vmatpush1.msra.mxu0 0.0
    %309 = vmatprep.subr.mxu0 0.0
    %310 = vmatpush1.msra.mxu0 0.0
    %311 = vmatprep.subr.mxu0 0.0
    %312 = vmatpush1.msra.mxu0 0.0
    %313 = vmatprep.subr.mxu0 0.0
    %314 = vmatpush1.msra.mxu0 0.0
    %315 = vmatprep.subr.mxu0 0.0
    %316 = vmatpush1.msra.mxu0 0.0
    %317 = vmatprep.subr.mxu0 0.0
    %318 = vmatpush1.msra.mxu0 0.0
    %319 = vmatprep.subr.mxu0 0.0
    %320 = vmatpush1.msra.mxu0 0.0
    %321 = vmatprep.subr.mxu0 0.0
    %322 = vmatpush1.msra.mxu0 0.0
    %323 = vmatprep.subr.mxu0 0.0
    %324 = vmatpush1.msra.mxu0 0.0
    %325 = vmatprep.subr.mxu0 0.0
    %326 = vmatpush1.msra.mxu0 0.0
    %327 = vmatprep.subr.mxu0 0.0
    %328 = vmatpush1.msra.mxu0 0.0
    %329 = vmatprep.subr.mxu0 0.0
    %330 = vmatpush1.msra.mxu0 0.0
    %331 = vmatprep.subr.mxu0 0.0
    %332 = vmatpush1.msra.mxu0 0.0
    %333 = vmatprep.subr.mxu0 0.0
    %334 = vmatpush1.msra.mxu0 0.0
    %335 = vmatprep.subr.mxu0 0.0
    %336 = vmatpush1.msra.mxu0 0.0
    %337 = vmatprep.subr.mxu0 0.0
    %338 = vmatpush1.msra.mxu0 0.0
    %339 = vmatprep.subr.mxu0 0.0
    %340 = vmatpush1.msra.mxu0 0.0
    %341 = vmatprep.mubr.f32.mxu0 0.0
    %342 = vmatmul.mubr.f32.gmra.mrb[0].mxu0 %v266
    %v343 = vpop.f32.mrb[0].mxu0
    %v344 = vadd.f32 %v241, %v343
    %v345 = vpop.f32.mrb[0].mxu0
    %346 = vmatprep.mubr.f32.mxu0 0.0
    %347 = vmatmul.mubr.f32.gmra.mrb[0].mxu0 %v269
    %v348 = vpop.f32.mrb[0].mxu0
    %v349 = vadd.f32 %v246, %v348
    %v350 = vpop.f32.mrb[0].mxu0
    %351 = vmatprep.mubr.f32.mxu0 0.0
    %352 = vmatmul.mubr.f32.gmra.mrb[0].mxu0 %v272
    %v353 = vpop.f32.mrb[0].mxu0
    %v354 = vadd.f32 %v251, %v353
    %v355 = vpop.f32.mrb[0].mxu0
    %356 = vmatprep.mubr.f32.mxu0 0.0
    %357 = vmatmul.mubr.f32.gmra.mrb[0].mxu0 %v275
    %v358 = vpop.f32.mrb[0].mxu0
    %v359 = vadd.f32 %v256, %v358
    %v360 = vpop.f32.mrb[0].mxu0
    %361 = vdwg.mxu0
    %v362 = vmax.f32 %v344, 0.0
    %v363 = vmax.f32 %v349, 0.0
    %v364 = vmax.f32 %v354, 0.0
    %v365 = vmax.f32 %v359, 0.0
    %v367 = vsel %vm145, %v233, 0
    %369 = vmatprep.subr.mxu0 0.0
    %370 = vmatpush1.msra.mxu0 %v362
    %371 = vmatprep.subr.mxu0 0.0
    %372 = vmatpush1.msra.mxu0 %v363
    %373 = vmatprep.subr.mxu0 0.0
    %374 = vmatpush1.msra.mxu0 %v364
    %375 = vmatprep.subr.mxu0 0.0
    %376 = vmatpush1.msra.mxu0 %v365
    %377 = vmatprep.subr.mxu0 0.0
    %378 = vmatpush1.msra.mxu0 0.0
    %379 = vmatprep.subr.mxu0 0.0
    %380 = vmatpush1.msra.mxu0 0.0
    %381 = vmatprep.subr.mxu0 0.0
    %382 = vmatpush1.msra.mxu0 0.0
    %383 = vmatprep.subr.mxu0 0.0
    %384 = vmatpush1.msra.mxu0 0.0
    %385 = vmatprep.subr.mxu0 0.0
    %386 = vmatpush1.msra.mxu0 0.0
    %387 = vmatprep.subr.mxu0 0.0
    %388 = vmatpush1.msra.mxu0 0.0
    %389 = vmatprep.subr.mxu0 0.0
    %390 = vmatpush1.msra.mxu0 0.0
    %391 = vmatprep.subr.mxu0 0.0
    %392 = vmatpush1.msra.mxu0 0.0
    %393 = vmatprep.subr.mxu0 0.0
    %394 = vmatpush1.msra.mxu0 0.0
    %395 = vmatprep.subr.mxu0 0.0
    %396 = vmatpush1.msra.mxu0 0.0
    %397 = vmatprep.subr.mxu0 0.0
    %398 = vmatpush1.msra.mxu0 0.0
    %399 = vmatprep.subr.mxu0 0.0
    %400 = vmatpush1.msra.mxu0 0.0
    %401 = vmatprep.subr.mxu0 0.0
    %402 = vmatpush1.msra.mxu0 0.0
    %403 = vmatprep.subr.mxu0 0.0
    %404 = vmatpush1.msra.mxu0 0.0
    %405 = vmatprep.subr.mxu0 0.0
    %406 = vmatpush1.msra.mxu0 0.0
    %407 = vmatprep.subr.mxu0 0.0
    %408 = vmatpush1.msra.mxu0 0.0
    %409 = vmatprep.subr.mxu0 0.0
    %410 = vmatpush1.msra.mxu0 0.0
    %411 = vmatprep.subr.mxu0 0.0
    %412 = vmatpush1.msra.mxu0 0.0
    %413 = vmatprep.subr.mxu0 0.0
    %414 = vmatpush1.msra.mxu0 0.0
    %415 = vmatprep.subr.mxu0 0.0
    %416 = vmatpush1.msra.mxu0 0.0
    %417 = vmatprep.subr.mxu0 0.0
    %418 = vmatpush1.msra.mxu0 0.0
    %419 = vmatprep.subr.mxu0 0.0
    %420 = vmatpush1.msra.mxu0 0.0
    %421 = vmatprep.subr.mxu0 0.0
    %422 = vmatpush1.msra.mxu0 0.0
    %423 = vmatprep.subr.mxu0 0.0
    %424 = vmatpush1.msra.mxu0 0.0
    %425 = vmatprep.subr.mxu0 0.0
    %426 = vmatpush1.msra.mxu0 0.0
    %427 = vmatprep.subr.mxu0 0.0
    %428 = vmatpush1.msra.mxu0 0.0
    %429 = vmatprep.subr.mxu0 0.0
    %430 = vmatpush1.msra.mxu0 0.0
    %431 = vmatprep.subr.mxu0 0.0
    %432 = vmatpush1.msra.mxu0 0.0
    %433 = vmatprep.mubr.f32.mxu0 0.0
    %434 = vmatmul.mubr.f32.gmra.mrb[0].mxu0 %v367
    %v435 = vpop.f32.mrb[0].mxu0
    %v436 = vadd.f32 %v262, %v435
    %v437 = vpop.f32.mrb[0].mxu0
    %438 = vdwg.mxu0
    %439 = vmatprep.subr.mxu0 0.0
    %440 = vmatpush1.msra.mxu0 %v228
    %441 = vmatprep.subr.mxu0 0.0
    %442 = vmatpush1.msra.mxu0 0.0
    %443 = vmatprep.subr.mxu0 0.0
    %444 = vmatpush1.msra.mxu0 0.0
    %445 = vmatprep.subr.mxu0 0.0
    %446 = vmatpush1.msra.mxu0 0.0
    %447 = vmatprep.subr.mxu0 0.0
    %448 = vmatpush1.msra.mxu0 0.0
    %449 = vmatprep.subr.mxu0 0.0
    %450 = vmatpush1.msra.mxu0 0.0
    %451 = vmatprep.subr.mxu0 0.0
    %452 = vmatpush1.msra.mxu0 0.0
    %453 = vmatprep.subr.mxu0 0.0
    %454 = vmatpush1.msra.mxu0 0.0
    %455 = vmatprep.subr.mxu0 0.0
    %456 = vmatpush1.msra.mxu0 0.0
    %457 = vmatprep.subr.mxu0 0.0
    %458 = vmatpush1.msra.mxu0 0.0
    %459 = vmatprep.subr.mxu0 0.0
    %460 = vmatpush1.msra.mxu0 0.0
    %461 = vmatprep.subr.mxu0 0.0
    %462 = vmatpush1.msra.mxu0 0.0
    %463 = vmatprep.subr.mxu0 0.0
    %464 = vmatpush1.msra.mxu0 0.0
    %465 = vmatprep.subr.mxu0 0.0
    %466 = vmatpush1.msra.mxu0 0.0
    %467 = vmatprep.subr.mxu0 0.0
    %468 = vmatpush1.msra.mxu0 0.0
    %469 = vmatprep.subr.mxu0 0.0
    %470 = vmatpush1.msra.mxu0 0.0
    %471 = vmatprep.subr.mxu0 0.0
    %472 = vmatpush1.msra.mxu0 0.0
    %473 = vmatprep.subr.mxu0 0.0
    %474 = vmatpush1.msra.mxu0 0.0
    %475 = vmatprep.subr.mxu0 0.0
    %476 = vmatpush1.msra.mxu0 0.0
    %477 = vmatprep.subr.mxu0 0.0
    %478 = vmatpush1.msra.mxu0 0.0
    %479 = vmatprep.subr.mxu0 0.0
    %480 = vmatpush1.msra.mxu0 0.0
    %481 = vmatprep.subr.mxu0 0.0
    %482 = vmatpush1.msra.mxu0 0.0
    %483 = vmatprep.subr.mxu0 0.0
    %484 = vmatpush1.msra.mxu0 0.0
    %485 = vmatprep.subr.mxu0 0.0
    %486 = vmatpush1.msra.mxu0 0.0
    %487 = vmatprep.subr.mxu0 0.0
    %488 = vmatpush1.msra.mxu0 0.0
    %489 = vmatprep.subr.mxu0 0.0
    %490 = vmatpush1.msra.mxu0 0.0
    %491 = vmatprep.subr.mxu0 0.0
    %492 = vmatpush1.msra.mxu0 0.0
    %493 = vmatprep.subr.mxu0 0.0
    %494 = vmatpush1.msra.mxu0 0.0
    %495 = vmatprep.subr.mxu0 0.0
    %496 = vmatpush1.msra.mxu0 0.0
    %497 = vmatprep.subr.mxu0 0.0
    %498 = vmatpush1.msra.mxu0 0.0
    %499 = vmatprep.subr.mxu0 0.0
    %500 = vmatpush1.msra.mxu0 0.0
    %501 = vmatprep.subr.mxu0 0.0
    %502 = vmatpush1.msra.mxu0 0.0
    %503 = vmatprep.mubr.f32.mxu0 0.0
    %504 = vmatmul.mubr.f32.gmra.mrb[0].mxu0 %v266
    %v505 = vpop.f32.mrb[0].mxu0
    %v506 = vadd.f32 %v241, %v505
    %v507 = vpop.f32.mrb[0].mxu0
    %508 = vmatprep.mubr.f32.mxu0 0.0
    %509 = vmatmul.mubr.f32.gmra.mrb[0].mxu0 %v269
    %v510 = vpop.f32.mrb[0].mxu0
    %v511 = vadd.f32 %v246, %v510
    %v512 = vpop.f32.mrb[0].mxu0
    %513 = vmatprep.mubr.f32.mxu0 0.0
    %514 = vmatmul.mubr.f32.gmra.mrb[0].mxu0 %v272
    %v515 = vpop.f32.mrb[0].mxu0
    %v516 = vadd.f32 %v251, %v515
    %v517 = vpop.f32.mrb[0].mxu0
    %518 = vmatprep.mubr.f32.mxu0 0.0
    %519 = vmatmul.mubr.f32.gmra.mrb[0].mxu0 %v275
    %v520 = vpop.f32.mrb[0].mxu0
    %v521 = vadd.f32 %v256, %v520
    %v522 = vpop.f32.mrb[0].mxu0
    %523 = vdwg.mxu0
    %v524 = vmax.f32 %v506, 0.0
    %v525 = vmax.f32 %v511, 0.0
    %v526 = vmax.f32 %v516, 0.0
    %v527 = vmax.f32 %v521, 0.0
    %528 = vmatprep.subr.mxu0 0.0
    %529 = vmatpush1.msra.mxu0 %v524
    %530 = vmatprep.subr.mxu0 0.0
    %531 = vmatpush1.msra.mxu0 %v525
    %532 = vmatprep.subr.mxu0 0.0
    %533 = vmatpush1.msra.mxu0 %v526
    %534 = vmatprep.subr.mxu0 0.0
    %535 = vmatpush1.msra.mxu0 %v527
    %536 = vmatprep.subr.mxu0 0.0
    %537 = vmatpush1.msra.mxu0 0.0
    %538 = vmatprep.subr.mxu0 0.0
    %539 = vmatpush1.msra.mxu0 0.0
    %540 = vmatprep.subr.mxu0 0.0
    %541 = vmatpush1.msra.mxu0 0.0
    %542 = vmatprep.subr.mxu0 0.0
    %543 = vmatpush1.msra.mxu0 0.0
    %544 = vmatprep.subr.mxu0 0.0
    %545 = vmatpush1.msra.mxu0 0.0
    %546 = vmatprep.subr.mxu0 0.0
    %547 = vmatpush1.msra.mxu0 0.0
    %548 = vmatprep.subr.mxu0 0.0
    %549 = vmatpush1.msra.mxu0 0.0
    %550 = vmatprep.subr.mxu0 0.0
    %551 = vmatpush1.msra.mxu0 0.0
    %552 = vmatprep.subr.mxu0 0.0
    %553 = vmatpush1.msra.mxu0 0.0
    %554 = vmatprep.subr.mxu0 0.0
    %555 = vmatpush1.msra.mxu0 0.0
    %556 = vmatprep.subr.mxu0 0.0
    %557 = vmatpush1.msra.mxu0 0.0
    %558 = vmatprep.subr.mxu0 0.0
    %559 = vmatpush1.msra.mxu0 0.0
    %560 = vmatprep.subr.mxu0 0.0
    %561 = vmatpush1.msra.mxu0 0.0
    %562 = vmatprep.subr.mxu0 0.0
    %563 = vmatpush1.msra.mxu0 0.0
    %564 = vmatprep.subr.mxu0 0.0
    %565 = vmatpush1.msra.mxu0 0.0
    %566 = vmatprep.subr.mxu0 0.0
    %567 = vmatpush1.msra.mxu0 0.0
    %568 = vmatprep.subr.mxu0 0.0
    %569 = vmatpush1.msra.mxu0 0.0
    %570 = vmatprep.subr.mxu0 0.0
    %571 = vmatpush1.msra.mxu0 0.0
    %572 = vmatprep.subr.mxu0 0.0
    %573 = vmatpush1.msra.mxu0 0.0
    %574 = vmatprep.subr.mxu0 0.0
    %575 = vmatpush1.msra.mxu0 0.0
    %576 = vmatprep.subr.mxu0 0.0
    %577 = vmatpush1.msra.mxu0 0.0
    %578 = vmatprep.subr.mxu0 0.0
    %579 = vmatpush1.msra.mxu0 0.0
    %580 = vmatprep.subr.mxu0 0.0
    %581 = vmatpush1.msra.mxu0 0.0
    %582 = vmatprep.subr.mxu0 0.0
    %583 = vmatpush1.msra.mxu0 0.0
    %584 = vmatprep.subr.mxu0 0.0
    %585 = vmatpush1.msra.mxu0 0.0
    %586 = vmatprep.subr.mxu0 0.0
    %587 = vmatpush1.msra.mxu0 0.0
    %588 = vmatprep.subr.mxu0 0.0
    %589 = vmatpush1.msra.mxu0 0.0
    %590 = vmatprep.subr.mxu0 0.0
    %591 = vmatpush1.msra.mxu0 0.0
    %592 = vmatprep.mubr.f32.mxu0 0.0
    %593 = vmatmul.mubr.f32.gmra.mrb[0].mxu0 %v367
    %v594 = vpop.f32.mrb[0].mxu0
    %v595 = vadd.f32 %v262, %v594
    %v596 = vpop.f32.mrb[0].mxu0
    %597 = vdwg.mxu0
    %v598 = vadd.f32 %v227, %v436
    %v599 = vadd.f32 %v228, %v595
    %s600 = scalar_lea.vmem %s1, 16
    %v601 = vld [vmem:[%s600] sm:$0xff]
    %v602 = vld [vmem:[%s600 + $0x8] sm:$0xff]
    %s603 = scalar_lea.vmem %s2, 1
    %v604 = vld [vmem:[%s603] sm:$0x1]
    %v606 = vlaneseq
    %v607 = vshrl.u32 %v606, 7
    %v608 = vsub.s32 0, %v607
    %v609 = vrot.slane %v604, %v608
    %v612 = vsel %vm50, %v598, 0
    %v615 = vsel %vm50, %v599, 0
    %617 = vmatprep.subr.mxu0 0.0
    %618 = vmatpush1.msra.mxu0 %v601
    %619 = vmatprep.subr.mxu0 0.0
    %620 = vmatpush1.msra.mxu0 %v602
    %621 = vmatprep.subr.mxu0 0.0
    %622 = vmatpush1.msra.mxu0 0.0
    %623 = vmatprep.subr.mxu0 0.0
    %624 = vmatpush1.msra.mxu0 0.0
    %625 = vmatprep.subr.mxu0 0.0
    %626 = vmatpush1.msra.mxu0 0.0
    %627 = vmatprep.subr.mxu0 0.0
    %628 = vmatpush1.msra.mxu0 0.0
    %629 = vmatprep.subr.mxu0 0.0
    %630 = vmatpush1.msra.mxu0 0.0
    %631 = vmatprep.subr.mxu0 0.0
    %632 = vmatpush1.msra.mxu0 0.0
    %633 = vmatprep.subr.mxu0 0.0
    %634 = vmatpush1.msra.mxu0 0.0
    %635 = vmatprep.subr.mxu0 0.0
    %636 = vmatpush1.msra.mxu0 0.0
    %637 = vmatprep.subr.mxu0 0.0
    %638 = vmatpush1.msra.mxu0 0.0
    %639 = vmatprep.subr.mxu0 0.0
    %640 = vmatpush1.msra.mxu0 0.0
    %641 = vmatprep.subr.mxu0 0.0
    %642 = vmatpush1.msra.mxu0 0.0
    %643 = vmatprep.subr.mxu0 0.0
    %644 = vmatpush1.msra.mxu0 0.0
    %645 = vmatprep.subr.mxu0 0.0
    %646 = vmatpush1.msra.mxu0 0.0
    %647 = vmatprep.subr.mxu0 0.0
    %648 = vmatpush1.msra.mxu0 0.0
    %649 = vmatprep.subr.mxu0 0.0
    %650 = vmatpush1.msra.mxu0 0.0
    %651 = vmatprep.subr.mxu0 0.0
    %652 = vmatpush1.msra.mxu0 0.0
    %653 = vmatprep.subr.mxu0 0.0
    %654 = vmatpush1.msra.mxu0 0.0
    %655 = vmatprep.subr.mxu0 0.0
    %656 = vmatpush1.msra.mxu0 0.0
    %657 = vmatprep.subr.mxu0 0.0
    %658 = vmatpush1.msra.mxu0 0.0
    %659 = vmatprep.subr.mxu0 0.0
    %660 = vmatpush1.msra.mxu0 0.0
    %661 = vmatprep.subr.mxu0 0.0
    %662 = vmatpush1.msra.mxu0 0.0
    %663 = vmatprep.subr.mxu0 0.0
    %664 = vmatpush1.msra.mxu0 0.0
    %665 = vmatprep.subr.mxu0 0.0
    %666 = vmatpush1.msra.mxu0 0.0
    %667 = vmatprep.subr.mxu0 0.0
    %668 = vmatpush1.msra.mxu0 0.0
    %669 = vmatprep.subr.mxu0 0.0
    %670 = vmatpush1.msra.mxu0 0.0
    %671 = vmatprep.subr.mxu0 0.0
    %672 = vmatpush1.msra.mxu0 0.0
    %673 = vmatprep.subr.mxu0 0.0
    %674 = vmatpush1.msra.mxu0 0.0
    %675 = vmatprep.subr.mxu0 0.0
    %676 = vmatpush1.msra.mxu0 0.0
    %677 = vmatprep.subr.mxu0 0.0
    %678 = vmatpush1.msra.mxu0 0.0
    %679 = vmatprep.subr.mxu0 0.0
    %680 = vmatpush1.msra.mxu0 0.0
    %681 = vmatprep.mubr.f32.mxu0 0.0
    %682 = vmatmul.mubr.f32.gmra.mrb[0].mxu0 %v612
    %v683 = vpop.f32.mrb[0].mxu0
    %v684 = vadd.f32 %v609, %v683
    %v685 = vpop.f32.mrb[0].mxu0
    %686 = vmatprep.mubr.f32.mxu0 0.0
    %687 = vmatmul.mubr.f32.gmra.mrb[0].mxu0 %v615
    %v688 = vpop.f32.mrb[0].mxu0
    %v689 = vadd.f32 %v609, %v688
    %v690 = vpop.f32.mrb[0].mxu0
    %691 = vdwg.mxu0
    %v692 = vmax.f32 %v684, 0.0
    %v693 = vmax.f32 %v689, 0.0
    %s694 = scalar_lea.vmem %s3, 32
    %v695 = vld [vmem:[%s694] sm:$0xff]
    %v696 = vld [vmem:[%s694 + $0x8] sm:$0xff]
    %v697 = vld [vmem:[%s694 + $0x10] sm:$0xff]
    %v698 = vld [vmem:[%s694 + $0x18] sm:$0xff]
    %s699 = scalar_lea.vmem %s4, 1
    %v700 = vld [vmem:[%s699] sm:$0x1]
    %v702 = vlaneseq
    %v703 = vshrl.u32 %v702, 7
    %v704 = vsub.s32 0, %v703
    %v705 = vrot.slane %v700, %v704
    %v708 = vsel %vm145, %v692, 0
    %v711 = vsel %vm145, %v693, 0
    %713 = vmatprep.subr.mxu0 0.0
    %714 = vmatpush1.msra.mxu0 %v695
    %715 = vmatprep.subr.mxu0 0.0
    %716 = vmatpush1.msra.mxu0 %v696
    %717 = vmatprep.subr.mxu0 0.0
    %718 = vmatpush1.msra.mxu0 %v697
    %719 = vmatprep.subr.mxu0 0.0
    %720 = vmatpush1.msra.mxu0 %v698
    %721 = vmatprep.subr.mxu0 0.0
    %722 = vmatpush1.msra.mxu0 0.0
    %723 = vmatprep.subr.mxu0 0.0
    %724 = vmatpush1.msra.mxu0 0.0
    %725 = vmatprep.subr.mxu0 0.0
    %726 = vmatpush1.msra.mxu0 0.0
    %727 = vmatprep.subr.mxu0 0.0
    %728 = vmatpush1.msra.mxu0 0.0
    %729 = vmatprep.subr.mxu0 0.0
    %730 = vmatpush1.msra.mxu0 0.0
    %731 = vmatprep.subr.mxu0 0.0
    %732 = vmatpush1.msra.mxu0 0.0
    %733 = vmatprep.subr.mxu0 0.0
    %734 = vmatpush1.msra.mxu0 0.0
    %735 = vmatprep.subr.mxu0 0.0
    %736 = vmatpush1.msra.mxu0 0.0
    %737 = vmatprep.subr.mxu0 0.0
    %738 = vmatpush1.msra.mxu0 0.0
    %739 = vmatprep.subr.mxu0 0.0
    %740 = vmatpush1.msra.mxu0 0.0
    %741 = vmatprep.subr.mxu0 0.0
    %742 = vmatpush1.msra.mxu0 0.0
    %743 = vmatprep.subr.mxu0 0.0
    %744 = vmatpush1.msra.mxu0 0.0
    %745 = vmatprep.subr.mxu0 0.0
    %746 = vmatpush1.msra.mxu0 0.0
    %747 = vmatprep.subr.mxu0 0.0
    %748 = vmatpush1.msra.mxu0 0.0
    %749 = vmatprep.subr.mxu0 0.0
    %750 = vmatpush1.msra.mxu0 0.0
    %751 = vmatprep.subr.mxu0 0.0
    %752 = vmatpush1.msra.mxu0 0.0
    %753 = vmatprep.subr.mxu0 0.0
    %754 = vmatpush1.msra.mxu0 0.0
    %755 = vmatprep.subr.mxu0 0.0
    %756 = vmatpush1.msra.mxu0 0.0
    %757 = vmatprep.subr.mxu0 0.0
    %758 = vmatpush1.msra.mxu0 0.0
    %759 = vmatprep.subr.mxu0 0.0
    %760 = vmatpush1.msra.mxu0 0.0
    %761 = vmatprep.subr.mxu0 0.0
    %762 = vmatpush1.msra.mxu0 0.0
    %763 = vmatprep.subr.mxu0 0.0
    %764 = vmatpush1.msra.mxu0 0.0
    %765 = vmatprep.subr.mxu0 0.0
    %766 = vmatpush1.msra.mxu0 0.0
    %767 = vmatprep.subr.mxu0 0.0
    %768 = vmatpush1.msra.mxu0 0.0
    %769 = vmatprep.subr.mxu0 0.0
    %770 = vmatpush1.msra.mxu0 0.0
    %771 = vmatprep.subr.mxu0 0.0
    %772 = vmatpush1.msra.mxu0 0.0
    %773 = vmatprep.subr.mxu0 0.0
    %774 = vmatpush1.msra.mxu0 0.0
    %775 = vmatprep.subr.mxu0 0.0
    %776 = vmatpush1.msra.mxu0 0.0
    %777 = vmatprep.mubr.f32.mxu0 0.0
    %778 = vmatmul.mubr.f32.gmra.mrb[0].mxu0 %v708
    %v779 = vpop.f32.mrb[0].mxu0
    %v780 = vadd.f32 %v705, %v779
    %v781 = vpop.f32.mrb[0].mxu0
    %782 = vmatprep.mubr.f32.mxu0 0.0
    %783 = vmatmul.mubr.f32.gmra.mrb[0].mxu0 %v711
    %v784 = vpop.f32.mrb[0].mxu0
    %v785 = vadd.f32 %v705, %v784
    %v786 = vpop.f32.mrb[0].mxu0
    %787 = vdwg.mxu0
    %v788 = vadd.f32 %v598, %v780
    %v789 = vadd.f32 %v599, %v785
    %s790 = scalar_lea.vmem %s5, 32
    %v791 = vld [vmem:[%s790] sm:$0xff]
    %v792 = vld [vmem:[%s790 + $0x8] sm:$0xff]
    %v793 = vld [vmem:[%s790 + $0x10] sm:$0xff]
    %v794 = vld [vmem:[%s790 + $0x18] sm:$0xff]
    %s795 = scalar_lea.vmem %s7, 8
    %v796 = vld [vmem:[%s795] sm:$0xff]
    %s797 = scalar_lea.vmem %s6, 32
    %v798 = vld [vmem:[%s797] sm:$0xff]
    %v799 = vld [vmem:[%s797 + $0x8] sm:$0xff]
    %v800 = vld [vmem:[%s797 + $0x10] sm:$0xff]
    %v801 = vld [vmem:[%s797 + $0x18] sm:$0xff]
    %803 = vset.pattern.permute.xlu0 0
    %804 = vperm.xlu0 %803, %v798
    %v805 = vpop.permute.xlu0 %804
    %808 = vset.pattern.permute.xlu0 0
    %809 = vperm.xlu0 %808, %v799
    %v810 = vpop.permute.xlu0 %809
    %813 = vset.pattern.permute.xlu0 0
    %814 = vperm.xlu0 %813, %v800
    %v815 = vpop.permute.xlu0 %814
    %818 = vset.pattern.permute.xlu0 0
    %819 = vperm.xlu0 %818, %v801
    %v820 = vpop.permute.xlu0 %819
    %s822 = scalar_lea.vmem %s8, 8
    %v823 = vld [vmem:[%s822] sm:$0xff]
    %825 = vset.pattern.permute.xlu0 0
    %826 = vperm.xlu0 %825, %v823
    %v827 = vpop.permute.xlu0 %826
    %v830 = vsel %vm264, %v791, 0
    %v833 = vsel %vm264, %v792, 0
    %v836 = vsel %vm264, %v793, 0
    %v839 = vsel %vm264, %v794, 0
    %841 = vmatprep.subr.mxu0 0.0
    %842 = vmatpush1.msra.mxu0 %v788
    %843 = vmatprep.subr.mxu0 0.0
    %844 = vmatpush1.msra.mxu0 0.0
    %845 = vmatprep.subr.mxu0 0.0
    %846 = vmatpush1.msra.mxu0 0.0
    %847 = vmatprep.subr.mxu0 0.0
    %848 = vmatpush1.msra.mxu0 0.0
    %849 = vmatprep.subr.mxu0 0.0
    %850 = vmatpush1.msra.mxu0 0.0
    %851 = vmatprep.subr.mxu0 0.0
    %852 = vmatpush1.msra.mxu0 0.0
    %853 = vmatprep.subr.mxu0 0.0
    %854 = vmatpush1.msra.mxu0 0.0
    %855 = vmatprep.subr.mxu0 0.0
    %856 = vmatpush1.msra.mxu0 0.0
    %857 = vmatprep.subr.mxu0 0.0
    %858 = vmatpush1.msra.mxu0 0.0
    %859 = vmatprep.subr.mxu0 0.0
    %860 = vmatpush1.msra.mxu0 0.0
    %861 = vmatprep.subr.mxu0 0.0
    %862 = vmatpush1.msra.mxu0 0.0
    %863 = vmatprep.subr.mxu0 0.0
    %864 = vmatpush1.msra.mxu0 0.0
    %865 = vmatprep.subr.mxu0 0.0
    %866 = vmatpush1.msra.mxu0 0.0
    %867 = vmatprep.subr.mxu0 0.0
    %868 = vmatpush1.msra.mxu0 0.0
    %869 = vmatprep.subr.mxu0 0.0
    %870 = vmatpush1.msra.mxu0 0.0
    %871 = vmatprep.subr.mxu0 0.0
    %872 = vmatpush1.msra.mxu0 0.0
    %873 = vmatprep.subr.mxu0 0.0
    %874 = vmatpush1.msra.mxu0 0.0
    %875 = vmatprep.subr.mxu0 0.0
    %876 = vmatpush1.msra.mxu0 0.0
    %877 = vmatprep.subr.mxu0 0.0
    %878 = vmatpush1.msra.mxu0 0.0
    %879 = vmatprep.subr.mxu0 0.0
    %880 = vmatpush1.msra.mxu0 0.0
    %881 = vmatprep.subr.mxu0 0.0
    %882 = vmatpush1.msra.mxu0 0.0
    %883 = vmatprep.subr.mxu0 0.0
    %884 = vmatpush1.msra.mxu0 0.0
    %885 = vmatprep.subr.mxu0 0.0
    %886 = vmatpush1.msra.mxu0 0.0
    %887 = vmatprep.subr.mxu0 0.0
    %888 = vmatpush1.msra.mxu0 0.0
    %889 = vmatprep.subr.mxu0 0.0
    %890 = vmatpush1.msra.mxu0 0.0
    %891 = vmatprep.subr.mxu0 0.0
    %892 = vmatpush1.msra.mxu0 0.0
    %893 = vmatprep.subr.mxu0 0.0
    %894 = vmatpush1.msra.mxu0 0.0
    %895 = vmatprep.subr.mxu0 0.0
    %896 = vmatpush1.msra.mxu0 0.0
    %897 = vmatprep.subr.mxu0 0.0
    %898 = vmatpush1.msra.mxu0 0.0
    %899 = vmatprep.subr.mxu0 0.0
    %900 = vmatpush1.msra.mxu0 0.0
    %901 = vmatprep.subr.mxu0 0.0
    %902 = vmatpush1.msra.mxu0 0.0
    %903 = vmatprep.subr.mxu0 0.0
    %904 = vmatpush1.msra.mxu0 0.0
    %905 = vmatprep.mubr.f32.mxu0 0.0
    %906 = vmatmul.mubr.f32.gmra.mrb[0].mxu0 %v830
    %v907 = vpop.f32.mrb[0].mxu0
    %v908 = vadd.f32 %v805, %v907
    %v909 = vpop.f32.mrb[0].mxu0
    %910 = vmatprep.mubr.f32.mxu0 0.0
    %911 = vmatmul.mubr.f32.gmra.mrb[0].mxu0 %v833
    %v912 = vpop.f32.mrb[0].mxu0
    %v913 = vadd.f32 %v810, %v912
    %v914 = vpop.f32.mrb[0].mxu0
    %915 = vmatprep.mubr.f32.mxu0 0.0
    %916 = vmatmul.mubr.f32.gmra.mrb[0].mxu0 %v836
    %v917 = vpop.f32.mrb[0].mxu0
    %v918 = vadd.f32 %v815, %v917
    %v919 = vpop.f32.mrb[0].mxu0
    %920 = vmatprep.mubr.f32.mxu0 0.0
    %921 = vmatmul.mubr.f32.gmra.mrb[0].mxu0 %v839
    %v922 = vpop.f32.mrb[0].mxu0
    %v923 = vadd.f32 %v820, %v922
    %v924 = vpop.f32.mrb[0].mxu0
    %925 = vdwg.mxu0
    %v926 = vmax.f32 %v908, 0.0
    %v927 = vmax.f32 %v913, 0.0
    %v928 = vmax.f32 %v918, 0.0
    %v929 = vmax.f32 %v923, 0.0
    %v931 = vsel %vm145, %v796, 0
    %933 = vmatprep.subr.mxu0 0.0
    %934 = vmatpush1.msra.mxu0 %v926
    %935 = vmatprep.subr.mxu0 0.0
    %936 = vmatpush1.msra.mxu0 %v927
    %937 = vmatprep.subr.mxu0 0.0
    %938 = vmatpush1.msra.mxu0 %v928
    %939 = vmatprep.subr.mxu0 0.0
    %940 = vmatpush1.msra.mxu0 %v929
    %941 = vmatprep.subr.mxu0 0.0
    %942 = vmatpush1.msra.mxu0 0.0
    %943 = vmatprep.subr.mxu0 0.0
    %944 = vmatpush1.msra.mxu0 0.0
    %945 = vmatprep.subr.mxu0 0.0
    %946 = vmatpush1.msra.mxu0 0.0
    %947 = vmatprep.subr.mxu0 0.0
    %948 = vmatpush1.msra.mxu0 0.0
    %949 = vmatprep.subr.mxu0 0.0
    %950 = vmatpush1.msra.mxu0 0.0
    %951 = vmatprep.subr.mxu0 0.0
    %952 = vmatpush1.msra.mxu0 0.0
    %953 = vmatprep.subr.mxu0 0.0
    %954 = vmatpush1.msra.mxu0 0.0
    %955 = vmatprep.subr.mxu0 0.0
    %956 = vmatpush1.msra.mxu0 0.0
    %957 = vmatprep.subr.mxu0 0.0
    %958 = vmatpush1.msra.mxu0 0.0
    %959 = vmatprep.subr.mxu0 0.0
    %960 = vmatpush1.msra.mxu0 0.0
    %961 = vmatprep.subr.mxu0 0.0
    %962 = vmatpush1.msra.mxu0 0.0
    %963 = vmatprep.subr.mxu0 0.0
    %964 = vmatpush1.msra.mxu0 0.0
    %965 = vmatprep.subr.mxu0 0.0
    %966 = vmatpush1.msra.mxu0 0.0
    %967 = vmatprep.subr.mxu0 0.0
    %968 = vmatpush1.msra.mxu0 0.0
    %969 = vmatprep.subr.mxu0 0.0
    %970 = vmatpush1.msra.mxu0 0.0
    %971 = vmatprep.subr.mxu0 0.0
    %972 = vmatpush1.msra.mxu0 0.0
    %973 = vmatprep.subr.mxu0 0.0
    %974 = vmatpush1.msra.mxu0 0.0
    %975 = vmatprep.subr.mxu0 0.0
    %976 = vmatpush1.msra.mxu0 0.0
    %977 = vmatprep.subr.mxu0 0.0
    %978 = vmatpush1.msra.mxu0 0.0
    %979 = vmatprep.subr.mxu0 0.0
    %980 = vmatpush1.msra.mxu0 0.0
    %981 = vmatprep.subr.mxu0 0.0
    %982 = vmatpush1.msra.mxu0 0.0
    %983 = vmatprep.subr.mxu0 0.0
    %984 = vmatpush1.msra.mxu0 0.0
    %985 = vmatprep.subr.mxu0 0.0
    %986 = vmatpush1.msra.mxu0 0.0
    %987 = vmatprep.subr.mxu0 0.0
    %988 = vmatpush1.msra.mxu0 0.0
    %989 = vmatprep.subr.mxu0 0.0
    %990 = vmatpush1.msra.mxu0 0.0
    %991 = vmatprep.subr.mxu0 0.0
    %992 = vmatpush1.msra.mxu0 0.0
    %993 = vmatprep.subr.mxu0 0.0
    %994 = vmatpush1.msra.mxu0 0.0
    %995 = vmatprep.subr.mxu0 0.0
    %996 = vmatpush1.msra.mxu0 0.0
    %997 = vmatprep.mubr.f32.mxu0 0.0
    %998 = vmatmul.mubr.f32.gmra.mrb[0].mxu0 %v931
    %v999 = vpop.f32.mrb[0].mxu0
    %v1000 = vadd.f32 %v827, %v999
    %v1001 = vpop.f32.mrb[0].mxu0
    %1002 = vdwg.mxu0
    %1003 = vmatprep.subr.mxu0 0.0
    %1004 = vmatpush1.msra.mxu0 %v789
    %1005 = vmatprep.subr.mxu0 0.0
    %1006 = vmatpush1.msra.mxu0 0.0
    %1007 = vmatprep.subr.mxu0 0.0
    %1008 = vmatpush1.msra.mxu0 0.0
    %1009 = vmatprep.subr.mxu0 0.0
    %1010 = vmatpush1.msra.mxu0 0.0
    %1011 = vmatprep.subr.mxu0 0.0
    %1012 = vmatpush1.msra.mxu0 0.0
    %1013 = vmatprep.subr.mxu0 0.0
    %1014 = vmatpush1.msra.mxu0 0.0
    %1015 = vmatprep.subr.mxu0 0.0
    %1016 = vmatpush1.msra.mxu0 0.0
    %1017 = vmatprep.subr.mxu0 0.0
    %1018 = vmatpush1.msra.mxu0 0.0
    %1019 = vmatprep.subr.mxu0 0.0
    %1020 = vmatpush1.msra.mxu0 0.0
    %1021 = vmatprep.subr.mxu0 0.0
    %1022 = vmatpush1.msra.mxu0 0.0
    %1023 = vmatprep.subr.mxu0 0.0
    %1024 = vmatpush1.msra.mxu0 0.0
    %1025 = vmatprep.subr.mxu0 0.0
    %1026 = vmatpush1.msra.mxu0 0.0
    %1027 = vmatprep.subr.mxu0 0.0
    %1028 = vmatpush1.msra.mxu0 0.0
    %1029 = vmatprep.subr.mxu0 0.0
    %1030 = vmatpush1.msra.mxu0 0.0
    %1031 = vmatprep.subr.mxu0 0.0
    %1032 = vmatpush1.msra.mxu0 0.0
    %1033 = vmatprep.subr.mxu0 0.0
    %1034 = vmatpush1.msra.mxu0 0.0
    %1035 = vmatprep.subr.mxu0 0.0
    %1036 = vmatpush1.msra.mxu0 0.0
    %1037 = vmatprep.subr.mxu0 0.0
    %1038 = vmatpush1.msra.mxu0 0.0
    %1039 = vmatprep.subr.mxu0 0.0
    %1040 = vmatpush1.msra.mxu0 0.0
    %1041 = vmatprep.subr.mxu0 0.0
    %1042 = vmatpush1.msra.mxu0 0.0
    %1043 = vmatprep.subr.mxu0 0.0
    %1044 = vmatpush1.msra.mxu0 0.0
    %1045 = vmatprep.subr.mxu0 0.0
    %1046 = vmatpush1.msra.mxu0 0.0
    %1047 = vmatprep.subr.mxu0 0.0
    %1048 = vmatpush1.msra.mxu0 0.0
    %1049 = vmatprep.subr.mxu0 0.0
    %1050 = vmatpush1.msra.mxu0 0.0
    %1051 = vmatprep.subr.mxu0 0.0
    %1052 = vmatpush1.msra.mxu0 0.0
    %1053 = vmatprep.subr.mxu0 0.0
    %1054 = vmatpush1.msra.mxu0 0.0
    %1055 = vmatprep.subr.mxu0 0.0
    %1056 = vmatpush1.msra.mxu0 0.0
    %1057 = vmatprep.subr.mxu0 0.0
    %1058 = vmatpush1.msra.mxu0 0.0
    %1059 = vmatprep.subr.mxu0 0.0
    %1060 = vmatpush1.msra.mxu0 0.0
    %1061 = vmatprep.subr.mxu0 0.0
    %1062 = vmatpush1.msra.mxu0 0.0
    %1063 = vmatprep.subr.mxu0 0.0
    %1064 = vmatpush1.msra.mxu0 0.0
    %1065 = vmatprep.subr.mxu0 0.0
    %1066 = vmatpush1.msra.mxu0 0.0
    %1067 = vmatprep.mubr.f32.mxu0 0.0
    %1068 = vmatmul.mubr.f32.gmra.mrb[0].mxu0 %v830
    %v1069 = vpop.f32.mrb[0].mxu0
    %v1070 = vadd.f32 %v805, %v1069
    %v1071 = vpop.f32.mrb[0].mxu0
    %1072 = vmatprep.mubr.f32.mxu0 0.0
    %1073 = vmatmul.mubr.f32.gmra.mrb[0].mxu0 %v833
    %v1074 = vpop.f32.mrb[0].mxu0
    %v1075 = vadd.f32 %v810, %v1074
    %v1076 = vpop.f32.mrb[0].mxu0
    %1077 = vmatprep.mubr.f32.mxu0 0.0
    %1078 = vmatmul.mubr.f32.gmra.mrb[0].mxu0 %v836
    %v1079 = vpop.f32.mrb[0].mxu0
    %v1080 = vadd.f32 %v815, %v1079
    %v1081 = vpop.f32.mrb[0].mxu0
    %1082 = vmatprep.mubr.f32.mxu0 0.0
    %1083 = vmatmul.mubr.f32.gmra.mrb[0].mxu0 %v839
    %v1084 = vpop.f32.mrb[0].mxu0
    %v1085 = vadd.f32 %v820, %v1084
    %v1086 = vpop.f32.mrb[0].mxu0
    %1087 = vdwg.mxu0
    %v1088 = vmax.f32 %v1070, 0.0
    %v1089 = vmax.f32 %v1075, 0.0
    %v1090 = vmax.f32 %v1080, 0.0
    %v1091 = vmax.f32 %v1085, 0.0
    %1092 = vmatprep.subr.mxu0 0.0
    %1093 = vmatpush1.msra.mxu0 %v1088
    %1094 = vmatprep.subr.mxu0 0.0
    %1095 = vmatpush1.msra.mxu0 %v1089
    %1096 = vmatprep.subr.mxu0 0.0
    %1097 = vmatpush1.msra.mxu0 %v1090
    %1098 = vmatprep.subr.mxu0 0.0
    %1099 = vmatpush1.msra.mxu0 %v1091
    %1100 = vmatprep.subr.mxu0 0.0
    %1101 = vmatpush1.msra.mxu0 0.0
    %1102 = vmatprep.subr.mxu0 0.0
    %1103 = vmatpush1.msra.mxu0 0.0
    %1104 = vmatprep.subr.mxu0 0.0
    %1105 = vmatpush1.msra.mxu0 0.0
    %1106 = vmatprep.subr.mxu0 0.0
    %1107 = vmatpush1.msra.mxu0 0.0
    %1108 = vmatprep.subr.mxu0 0.0
    %1109 = vmatpush1.msra.mxu0 0.0
    %1110 = vmatprep.subr.mxu0 0.0
    %1111 = vmatpush1.msra.mxu0 0.0
    %1112 = vmatprep.subr.mxu0 0.0
    %1113 = vmatpush1.msra.mxu0 0.0
    %1114 = vmatprep.subr.mxu0 0.0
    %1115 = vmatpush1.msra.mxu0 0.0
    %1116 = vmatprep.subr.mxu0 0.0
    %1117 = vmatpush1.msra.mxu0 0.0
    %1118 = vmatprep.subr.mxu0 0.0
    %1119 = vmatpush1.msra.mxu0 0.0
    %1120 = vmatprep.subr.mxu0 0.0
    %1121 = vmatpush1.msra.mxu0 0.0
    %1122 = vmatprep.subr.mxu0 0.0
    %1123 = vmatpush1.msra.mxu0 0.0
    %1124 = vmatprep.subr.mxu0 0.0
    %1125 = vmatpush1.msra.mxu0 0.0
    %1126 = vmatprep.subr.mxu0 0.0
    %1127 = vmatpush1.msra.mxu0 0.0
    %1128 = vmatprep.subr.mxu0 0.0
    %1129 = vmatpush1.msra.mxu0 0.0
    %1130 = vmatprep.subr.mxu0 0.0
    %1131 = vmatpush1.msra.mxu0 0.0
    %1132 = vmatprep.subr.mxu0 0.0
    %1133 = vmatpush1.msra.mxu0 0.0
    %1134 = vmatprep.subr.mxu0 0.0
    %1135 = vmatpush1.msra.mxu0 0.0
    %1136 = vmatprep.subr.mxu0 0.0
    %1137 = vmatpush1.msra.mxu0 0.0
    %1138 = vmatprep.subr.mxu0 0.0
    %1139 = vmatpush1.msra.mxu0 0.0
    %1140 = vmatprep.subr.mxu0 0.0
    %1141 = vmatpush1.msra.mxu0 0.0
    %1142 = vmatprep.subr.mxu0 0.0
    %1143 = vmatpush1.msra.mxu0 0.0
    %1144 = vmatprep.subr.mxu0 0.0
    %1145 = vmatpush1.msra.mxu0 0.0
    %1146 = vmatprep.subr.mxu0 0.0
    %1147 = vmatpush1.msra.mxu0 0.0
    %1148 = vmatprep.subr.mxu0 0.0
    %1149 = vmatpush1.msra.mxu0 0.0
    %1150 = vmatprep.subr.mxu0 0.0
    %1151 = vmatpush1.msra.mxu0 0.0
    %1152 = vmatprep.subr.mxu0 0.0
    %1153 = vmatpush1.msra.mxu0 0.0
    %1154 = vmatprep.subr.mxu0 0.0
    %1155 = vmatpush1.msra.mxu0 0.0
    %1156 = vmatprep.mubr.f32.mxu0 0.0
    %1157 = vmatmul.mubr.f32.gmra.mrb[0].mxu0 %v931
    %v1158 = vpop.f32.mrb[0].mxu0
    %v1159 = vadd.f32 %v827, %v1158
    %v1160 = vpop.f32.mrb[0].mxu0
    %1161 = vdwg.mxu0
    %v1162 = vadd.f32 %v788, %v1000
    %v1163 = vadd.f32 %v789, %v1159
    %v1164 = vld [vmem:[%s9] sm:$0xff]
    %v1165 = vld [vmem:[%s9 + $0x8] sm:$0xff]
    %v1166 = vld [vmem:[%s10] sm:$0x1]
    %v1168 = vlaneseq
    %v1169 = vshrl.u32 %v1168, 7
    %v1170 = vsub.s32 0, %v1169
    %v1171 = vrot.slane %v1166, %v1170
    %v1174 = vsel %vm50, %v1162, 0
    %v1177 = vsel %vm50, %v1163, 0
    %1179 = vmatprep.subr.mxu0 0.0
    %1180 = vmatpush1.msra.mxu0 %v1164
    %1181 = vmatprep.subr.mxu0 0.0
    %1182 = vmatpush1.msra.mxu0 %v1165
    %1183 = vmatprep.subr.mxu0 0.0
    %1184 = vmatpush1.msra.mxu0 0.0
    %1185 = vmatprep.subr.mxu0 0.0
    %1186 = vmatpush1.msra.mxu0 0.0
    %1187 = vmatprep.subr.mxu0 0.0
    %1188 = vmatpush1.msra.mxu0 0.0
    %1189 = vmatprep.subr.mxu0 0.0
    %1190 = vmatpush1.msra.mxu0 0.0
    %1191 = vmatprep.subr.mxu0 0.0
    %1192 = vmatpush1.msra.mxu0 0.0
    %1193 = vmatprep.subr.mxu0 0.0
    %1194 = vmatpush1.msra.mxu0 0.0
    %1195 = vmatprep.subr.mxu0 0.0
    %1196 = vmatpush1.msra.mxu0 0.0
    %1197 = vmatprep.subr.mxu0 0.0
    %1198 = vmatpush1.msra.mxu0 0.0
    %1199 = vmatprep.subr.mxu0 0.0
    %1200 = vmatpush1.msra.mxu0 0.0
    %1201 = vmatprep.subr.mxu0 0.0
    %1202 = vmatpush1.msra.mxu0 0.0
    %1203 = vmatprep.subr.mxu0 0.0
    %1204 = vmatpush1.msra.mxu0 0.0
    %1205 = vmatprep.subr.mxu0 0.0
    %1206 = vmatpush1.msra.mxu0 0.0
    %1207 = vmatprep.subr.mxu0 0.0
    %1208 = vmatpush1.msra.mxu0 0.0
    %1209 = vmatprep.subr.mxu0 0.0
    %1210 = vmatpush1.msra.mxu0 0.0
    %1211 = vmatprep.subr.mxu0 0.0
    %1212 = vmatpush1.msra.mxu0 0.0
    %1213 = vmatprep.subr.mxu0 0.0
    %1214 = vmatpush1.msra.mxu0 0.0
    %1215 = vmatprep.subr.mxu0 0.0
    %1216 = vmatpush1.msra.mxu0 0.0
    %1217 = vmatprep.subr.mxu0 0.0
    %1218 = vmatpush1.msra.mxu0 0.0
    %1219 = vmatprep.subr.mxu0 0.0
    %1220 = vmatpush1.msra.mxu0 0.0
    %1221 = vmatprep.subr.mxu0 0.0
    %1222 = vmatpush1.msra.mxu0 0.0
    %1223 = vmatprep.subr.mxu0 0.0
    %1224 = vmatpush1.msra.mxu0 0.0
    %1225 = vmatprep.subr.mxu0 0.0
    %1226 = vmatpush1.msra.mxu0 0.0
    %1227 = vmatprep.subr.mxu0 0.0
    %1228 = vmatpush1.msra.mxu0 0.0
    %1229 = vmatprep.subr.mxu0 0.0
    %1230 = vmatpush1.msra.mxu0 0.0
    %1231 = vmatprep.subr.mxu0 0.0
    %1232 = vmatpush1.msra.mxu0 0.0
    %1233 = vmatprep.subr.mxu0 0.0
    %1234 = vmatpush1.msra.mxu0 0.0
    %1235 = vmatprep.subr.mxu0 0.0
    %1236 = vmatpush1.msra.mxu0 0.0
    %1237 = vmatprep.subr.mxu0 0.0
    %1238 = vmatpush1.msra.mxu0 0.0
    %1239 = vmatprep.subr.mxu0 0.0
    %1240 = vmatpush1.msra.mxu0 0.0
    %1241 = vmatprep.subr.mxu0 0.0
    %1242 = vmatpush1.msra.mxu0 0.0
    %1243 = vmatprep.mubr.f32.mxu0 0.0
    %1244 = vmatmul.mubr.f32.gmra.mrb[0].mxu0 %v1174
    %v1245 = vpop.f32.mrb[0].mxu0
    %v1246 = vadd.f32 %v1171, %v1245
    %v1247 = vpop.f32.mrb[0].mxu0
    %1248 = vmatprep.mubr.f32.mxu0 0.0
    %1249 = vmatmul.mubr.f32.gmra.mrb[0].mxu0 %v1177
    %v1250 = vpop.f32.mrb[0].mxu0
    %v1251 = vadd.f32 %v1171, %v1250
    %v1252 = vpop.f32.mrb[0].mxu0
    %1253 = vdwg.mxu0
    %vm1254 = vcmask 97280
    %1255 = vst.msk [vmem:[#allocation2] sm:$0xff] %vm1254, %v1246
    %1256 = vst.msk [vmem:[#allocation2 + $0x8] sm:$0xff] %vm1254, %v1251
    // Predicated region
    $region46: #{tpu_custom_call.1} parent=1 // pred_check
      _
    $region47: #{tpu_custom_call.1} parent=1 // pred_check_branch
      %1258 = sbr.rel (0) target = $region49
    $region48: #{tpu_custom_call.1} parent=1 // pred_region
      %s1260 = ssub.s32 256, 256
      %1261 = vsyncadd [#allocation3], %s1260
      %s1262 = sshll.u32 [#allocation2], 4
      %s1263 = int_to_ptr.vmem [resolvable:$true] %s1262
      %1268 = dma.vmem_to_hbm [thread:$0]  %s1263, 256, %s11, [#allocation3], 128, 128, 8
    $region49: #{tpu_custom_call.1} parent=1 // pred_fallthru
      _
    // Predicated region
    $region50: #{tpu_custom_call.1} parent=1 // pred_check
      _
    $region51: #{tpu_custom_call.1} parent=1 // pred_check_branch
      %1270 = sbr.rel (0) target = $region53
    $region52: #{tpu_custom_call.1} parent=1 // pred_region
      %1271 = dma.done [#allocation3], 256
    $region53: #{tpu_custom_call.1} parent=1 // pred_fallthru
      _
    %1272 = vsyncpa [#allocation3], 1

</llo_original>
